<compile_context>
chip_gen: v7x
topology: tpu7x:2x2x1
jax: 0.10.0
libtpu: 0.0.40
codegen_flags: <defaults>
</compile_context>

<pallas_src>
import numpy as np
import jax
import jax.numpy as jnp
from jax import lax
from jax.experimental import pallas as pl
from jax.experimental.pallas import tpu as pltpu


# ---------------------------- Pallas kernels ----------------------------

def _stem_kernel(x_ref, wu_ref, su_ref, bu_ref, wb_ref, bb_ref, y1_ref, yb_ref):
    """up CBL (1x1 conv + folded BN + SiLU) and bottom 1x1 conv (+bias), one read of x."""
    x = x_ref[...]                                                    # bf16 (TM, C1p)
    u = jnp.dot(x, wu_ref[...], preferred_element_type=jnp.float32)  # MXU, f32 acc
    u = u * su_ref[...] + bu_ref[...]
    y1_ref[...] = (u * jax.nn.sigmoid(u)).astype(y1_ref.dtype)
    v = jnp.dot(x, wb_ref[...], preferred_element_type=jnp.float32) + bb_ref[...]
    yb_ref[...] = v.astype(yb_ref.dtype)


def _resunit_body(y_ref, sc_ref, w1_ref, s1_ref, b1_ref, w2_ref, s2_ref, b2_ref,
                  o_ref, tpad_ref):
    """One res_unit: [1x1 CBL] -> [3x3 CBL] (+ shortcut), all fused in one kernel."""
    _, H, W, Cp = o_ref.shape

    # r1: 1x1 conv + folded BN + SiLU (fused; no HBM round trip for t)
    y = y_ref[0].reshape(H * W, Cp)                                   # bf16
    t = jnp.dot(y, w1_ref[...], preferred_element_type=jnp.float32)
    t = t * s1_ref[...] + b1_ref[...]
    t = t * jax.nn.sigmoid(t)

    # zero padding (pad=1) done in-kernel: zero the halo buffer, write the interior
    tpad_ref[...] = jnp.zeros_like(tpad_ref)
    tpad_ref[1:H + 1, 1:W + 1, :] = t.reshape(H, W, Cp).astype(tpad_ref.dtype)

    # 3x3 conv as 3 matmuls (group the 3 dx taps per filter row -> K = 3*Cp)
    acc = jnp.zeros((H * W, Cp), jnp.float32)
    for dy in range(3):                                               # static unroll
        slab = tpad_ref[dy:dy + H, :, :]                              # (H, W+2, Cp)
        rows = jnp.concatenate(
            [slab[:, 0:W, :], slab[:, 1:W + 1, :], slab[:, 2:W + 2, :]], axis=-1)
        acc = acc + jnp.dot(rows.reshape(H * W, 3 * Cp), w2_ref[dy],
                            preferred_element_type=jnp.float32)

    z = acc * s2_ref[...] + b2_ref[...]
    z = z * jax.nn.sigmoid(z)
    if sc_ref is not None:                                            # ResUnit shortcut (last repeat)
        z = z + sc_ref[0].reshape(H * W, Cp).astype(jnp.float32)
    o_ref[...] = z.reshape(1, H, W, Cp).astype(o_ref.dtype)


def _resunit_kernel_sc(y_ref, sc_ref, w1, s1, b1, w2, s2, b2, o_ref, tpad):
    _resunit_body(y_ref, sc_ref, w1, s1, b1, w2, s2, b2, o_ref, tpad)


def _resunit_kernel_nosc(y_ref, w1, s1, b1, w2, s2, b2, o_ref, tpad):
    _resunit_body(y_ref, None, w1, s1, b1, w2, s2, b2, o_ref, tpad)


def _tie_kernel(y_ref, yb_ref, st_ref, bt_ref, sb_ref, bb_ref, wt_ref, wb_ref, o_ref):
    """tie: BN(2c_) + LeakyReLU(0.01) + 1x1 conv, with the weight split so the channel
    concat is never materialized (matmul over a channel concat = sum of two matmuls)."""
    a = y_ref[...].astype(jnp.float32) * st_ref[...] + bt_ref[...]
    a = jnp.where(a >= 0, a, 0.01 * a)
    b = yb_ref[...].astype(jnp.float32) * sb_ref[...] + bb_ref[...]
    b = jnp.where(b >= 0, b, 0.01 * b)
    o = jnp.dot(a.astype(jnp.bfloat16), wt_ref[...], preferred_element_type=jnp.float32)
    o = o + jnp.dot(b.astype(jnp.bfloat16), wb_ref[...], preferred_element_type=jnp.float32)
    o_ref[...] = o.astype(o_ref.dtype)


# ---------------------------- pallas_call wrappers ----------------------------

def _choose_tm(P):
    # Big row tiles amortize the ~0.35us/step overhead; pick the largest tile that
    # divides P so no tail masking is needed (P = N*H*W is a multiple of 8 here).
    for tm in (2048, 1024, 512, 256, 128, 64, 32, 16, 8):
        if P % tm == 0:
            return tm
    return P  # ragged P fallback: single whole block (not hit at these shapes)


def stem(x_flat, q):
    P, C1p = x_flat.shape
    Cp = q['Cp']
    TM = _choose_tm(P)
    rows = lambda i: (i, 0)
    rep = lambda i: (0, 0)
    return pl.pallas_call(
        _stem_kernel,
        out_shape=(jax.ShapeDtypeStruct((P, Cp), jnp.bfloat16),
                   jax.ShapeDtypeStruct((P, Cp), jnp.bfloat16)),
        grid=(P // TM,),
        in_specs=[
            pl.BlockSpec((TM, C1p), rows),
            pl.BlockSpec((C1p, Cp), rep),
            pl.BlockSpec((1, Cp), rep),
            pl.BlockSpec((1, Cp), rep),
            pl.BlockSpec((C1p, Cp), rep),
            pl.BlockSpec((1, Cp), rep),
        ],
        out_specs=[pl.BlockSpec((TM, Cp), rows),
                   pl.BlockSpec((TM, Cp), rows)],
        compiler_params=pltpu.CompilerParams(dimension_semantics=("parallel",)),
    )(x_flat, q['up_w'], q['up_scale'], q['up_bias'], q['bot_w'], q['bot_b'])


def resunit(y, shortcut, q):
    N, H, W, Cp = y.shape
    img = lambda b: (b, 0, 0, 0)
    rep2 = lambda b: (0, 0)
    rep3 = lambda b: (0, 0, 0)
    w_specs = [
        pl.BlockSpec((Cp, Cp), rep2),
        pl.BlockSpec((1, Cp), rep2),
        pl.BlockSpec((1, Cp), rep2),
        pl.BlockSpec((3, 3 * Cp, Cp), rep3),
        pl.BlockSpec((1, Cp), rep2),
        pl.BlockSpec((1, Cp), rep2),
    ]
    if shortcut is not None:
        kernel = _resunit_kernel_sc
        in_specs = [pl.BlockSpec((1, H, W, Cp), img),
                    pl.BlockSpec((1, H, W, Cp), img)] + w_specs
        args = (y, shortcut, q['r1_w'], q['r1_scale'], q['r1_bias'],
                q['r2_w'], q['r2_scale'], q['r2_bias'])
    else:
        # non-final repeats: no shortcut input at all (no zero-tensor DMA / add)
        kernel = _resunit_kernel_nosc
        in_specs = [pl.BlockSpec((1, H, W, Cp), img)] + w_specs
        args = (y, q['r1_w'], q['r1_scale'], q['r1_bias'],
                q['r2_w'], q['r2_scale'], q['r2_bias'])
    return pl.pallas_call(
        kernel,
        out_shape=jax.ShapeDtypeStruct((N, H, W, Cp), jnp.bfloat16),
        grid=(N,),
        in_specs=in_specs,
        out_specs=pl.BlockSpec((1, H, W, Cp), img),
        scratch_shapes=[pltpu.VMEM((H + 2, W + 2, Cp), jnp.bfloat16)],
        compiler_params=pltpu.CompilerParams(dimension_semantics=("parallel",)),
    )(*args)


def tie(y_flat, yb_flat, q):
    P, Cp = y_flat.shape
    C2p = q['C2p']
    TM = _choose_tm(P)
    rows = lambda i: (i, 0)
    rep = lambda i: (0, 0)
    return pl.pallas_call(
        _tie_kernel,
        out_shape=jax.ShapeDtypeStruct((P, C2p), jnp.float32),
        grid=(P // TM,),
        in_specs=[
            pl.BlockSpec((TM, Cp), rows), pl.BlockSpec((TM, Cp), rows),
            pl.BlockSpec((1, Cp), rep), pl.BlockSpec((1, Cp), rep),
            pl.BlockSpec((1, Cp), rep), pl.BlockSpec((1, Cp), rep),
            pl.BlockSpec((Cp, C2p), rep), pl.BlockSpec((Cp, C2p), rep),
        ],
        out_specs=pl.BlockSpec((TM, C2p), rows),
        compiler_params=pltpu.CompilerParams(dimension_semantics=("parallel",)),
    )(y_flat, yb_flat, q['tie_scale_top'], q['tie_bias_top'],
      q['tie_scale_bot'], q['tie_bias_bot'], q['tie_w_top'], q['tie_w_bot'])


# ---------------------------- parameters ----------------------------

def fold_bn(gamma, beta, mean, var, eps=1e-5):
    scale = gamma / jnp.sqrt(var + eps)
    bias = beta - mean * scale
    return scale.reshape(1, -1), bias.reshape(1, -1)


def make_bn(key, c):
    k1, k2, k3, k4 = jax.random.split(key, 4)
    gamma = jax.random.uniform(k1, (c,), minval=0.5, maxval=1.5)
    beta = jax.random.normal(k2, (c,)) * 0.1
    mean = jax.random.normal(k3, (c,)) * 0.1
    var = jax.random.uniform(k4, (c,), minval=0.5, maxval=1.5)
    return fold_bn(gamma, beta, mean, var)


def init_csp1_params(key, c1, c2):
    """Parameters at the true (unpadded) sizes — used directly by the pure-JAX reference."""
    c_ = c2 // 2
    ks = jax.random.split(key, 10)
    p = {}
    # up: CBL(c1, c_, 1, 1)   (1x1 conv weight stored as (Cin, Cout))
    p['up_w'] = jax.random.normal(ks[0], (c1, c_), jnp.float32) * 0.2
    p['up_scale'], p['up_bias'] = make_bn(ks[1], c_)
    # ResUnit_n: CBL(c_, c_, 1, 1) then CBL(c_, c_, 3, 1)
    p['r1_w'] = jax.random.normal(ks[2], (c_, c_), jnp.float32) * 0.2
    p['r1_scale'], p['r1_bias'] = make_bn(ks[3], c_)
    p['r2_w'] = jax.random.normal(ks[4], (3, 3, c_, c_), jnp.float32) * 0.2   # HWIO
    p['r2_scale'], p['r2_bias'] = make_bn(ks[5], c_)
    # bottom: Conv2d(c1, c_, 1, 1, 0) with bias
    p['bot_w'] = jax.random.normal(ks[6], (c1, c_), jnp.float32) * 0.2
    p['bot_b'] = (jax.random.normal(ks[7], (c_,), jnp.float32) * 0.1).reshape(1, c_)
    # tie: BN(2c_) + LeakyReLU + Conv2d(2c_, c2, 1, 1, 0, bias=False)
    p['tie_scale'], p['tie_bias'] = make_bn(ks[8], 2 * c_)
    p['tie_w'] = jax.random.normal(ks[9], (2 * c_, c2), jnp.float32) * 0.2
    return p


def _pad_to(n, m=128):
    return ((n + m - 1) // m) * m


def _pad_mat(w, r, c):
    return jnp.zeros((r, c), w.dtype).at[:w.shape[0], :w.shape[1]].set(w)


def _pad_vec(v, n, fill):
    return jnp.full((n,), fill, v.dtype).at[:v.shape[0]].set(v).reshape(1, n)


def prep_pallas_params(p, c1, c2):
    """Pad every channel dim to a multiple of 128 (lane-dense matmuls/stores), cast weights
    to bf16, pre-group the 3x3 weight per filter row, and split the tie BN/weight in two.
    Padded weight/bias entries are zero, so padded channels stay exactly zero everywhere."""
    c_ = c2 // 2
    C1p, Cp, C2p = _pad_to(c1), _pad_to(c_), _pad_to(c2)
    bf = jnp.bfloat16
    q = {'c1': c1, 'c2': c2, 'c_': c_, 'C1p': C1p, 'Cp': Cp, 'C2p': C2p}
    q['up_w'] = _pad_mat(p['up_w'], C1p, Cp).astype(bf)
    q['up_scale'] = _pad_vec(p['up_scale'][0], Cp, 1.0)
    q['up_bias'] = _pad_vec(p['up_bias'][0], Cp, 0.0)
    q['bot_w'] = _pad_mat(p['bot_w'], C1p, Cp).astype(bf)
    q['bot_b'] = _pad_vec(p['bot_b'][0], Cp, 0.0)
    q['r1_w'] = _pad_mat(p['r1_w'], Cp, Cp).astype(bf)
    q['r1_scale'] = _pad_vec(p['r1_scale'][0], Cp, 1.0)
    q['r1_bias'] = _pad_vec(p['r1_bias'][0], Cp, 0.0)
    # 3x3 HWIO weight -> grouped per filter row: (3, 3*Cp, Cp) matching the in-kernel concat
    w2 = jnp.zeros((3, 3, Cp, Cp), jnp.float32).at[:, :, :c_, :c_].set(p['r2_w'])
    q['r2_w'] = w2.reshape(3, 3 * Cp, Cp).astype(bf)
    q['r2_scale'] = _pad_vec(p['r2_scale'][0], Cp, 1.0)
    q['r2_bias'] = _pad_vec(p['r2_bias'][0], Cp, 0.0)
    # tie: split into up-half / bottom-half (removes the channel concat entirely)
    q['tie_scale_top'] = _pad_vec(p['tie_scale'][0][:c_], Cp, 1.0)
    q['tie_bias_top'] = _pad_vec(p['tie_bias'][0][:c_], Cp, 0.0)
    q['tie_scale_bot'] = _pad_vec(p['tie_scale'][0][c_:], Cp, 1.0)
    q['tie_bias_bot'] = _pad_vec(p['tie_bias'][0][c_:], Cp, 0.0)
    q['tie_w_top'] = _pad_mat(p['tie_w'][:c_], Cp, C2p).astype(bf)
    q['tie_w_bot'] = _pad_mat(p['tie_w'][c_:], Cp, C2p).astype(bf)
    return q


# ---------------------------- forward (Pallas) ----------------------------

def csp1_n_forward(x_nchw, q, n_resblock=1):
    # NCHW <-> NHWC happens once at the module boundary; a full model would stay NHWC.
    c1, c2 = q['c1'], q['c2']
    C1p, Cp, C2p = q['C1p'], q['Cp'], q['C2p']
    x = jnp.transpose(x_nchw, (0, 2, 3, 1))                      # NCHW -> NHWC
    N, H, W, _ = x.shape
    P = N * H * W
    x_pad = jnp.pad(x.astype(jnp.bfloat16), ((0, 0), (0, 0), (0, 0), (0, C1p - c1)))
    x_flat = x_pad.reshape(P, C1p)

    # stem: up CBL (k=1, s=1) and bottom 1x1 conv, fused over one read of x
    y1_flat, yb_flat = stem(x_flat, q)
    y1 = y1_flat.reshape(N, H, W, Cp)

    # ResUnit_n: same res_unit applied n times (shared weights), shortcut added once at the end
    y = y1
    for i in range(n_resblock):
        sc = y1 if i == n_resblock - 1 else None
        y = resunit(y, sc, q)

    # tie: BN + LeakyReLU + 1x1 conv with split weights (no concat)
    out_flat = tie(y.reshape(P, Cp), yb_flat, q)
    out = out_flat.reshape(N, H, W, C2p)[..., :c2]
    return jnp.transpose(out, (0, 3, 1, 2))                      # NHWC -> NCHW


# ---------------------------- pure-JAX reference ----------------------------

def _silu(x):
    return x * jax.nn.sigmoid(x)


def csp1_n_reference(x_nchw, p, n_resblock=1):
    hp = lax.Precision.HIGHEST
    x = jnp.transpose(x_nchw, (0, 2, 3, 1))

    def pw(v, w):
        return jnp.einsum('nhwc,cd->nhwd', v, w, precision=hp)

    y1 = _silu(pw(x, p['up_w']) * p['up_scale'][0] + p['up_bias'][0])
    y = y1
    for _ in range(n_resblock):
        t = _silu(pw(y, p['r1_w']) * p['r1_scale'][0] + p['r1_bias'][0])
        c = lax.conv_general_dilated(t, p['r2_w'], (1, 1), 'SAME',
                                     dimension_numbers=('NHWC', 'HWIO', 'NHWC'),
                                     precision=hp)
        y = _silu(c * p['r2_scale'][0] + p['r2_bias'][0])
    y = y + y1
    yb = pw(x, p['bot_w']) + p['bot_b'][0]
    total = jnp.concatenate([y, yb], axis=-1)
    t = total * p['tie_scale'][0] + p['tie_bias'][0]
    t = jnp.where(t >= 0, t, 0.01 * t)
    out = pw(t, p['tie_w'])
    return jnp.transpose(out, (0, 3, 1, 2))


# ---------------------------- main ----------------------------

if __name__ == "__main__":
    key = jax.random.PRNGKey(0)
    k_x, k_p = jax.random.split(key)

    c1, c2, N, H, W = 4, 8, 2, 16, 16
    x = jax.random.normal(k_x, (N, c1, H, W), jnp.float32)       # NCHW, like PyTorch
    params = init_csp1_params(k_p, c1, c2)
    pparams = prep_pallas_params(params, c1, c2)

    out = csp1_n_forward(x, pparams, n_resblock=1)
    out = jax.block_until_ready(out)

    ref = csp1_n_reference(x, params, n_resblock=1)
    # tolerance accounts for bf16 MXU inputs vs the f32 HIGHEST-precision reference
    np.testing.assert_allclose(np.asarray(out), np.asarray(ref), atol=3e-2, rtol=3e-2)

    print("KERNEL_OK")
</pallas_src>

<mosaic_0001>
module attributes {stable_mosaic.version = 11 : i64} {
  func.func @_stem_kernel(%arg0: i32, %arg1: memref<512x128xbf16, #tpu.memory_space<vmem>>, %arg2: memref<128x128xbf16, #tpu.memory_space<vmem>>, %arg3: memref<1x128xf32, #tpu.memory_space<vmem>>, %arg4: memref<1x128xf32, #tpu.memory_space<vmem>>, %arg5: memref<128x128xbf16, #tpu.memory_space<vmem>>, %arg6: memref<1x128xf32, #tpu.memory_space<vmem>>, %arg7: memref<512x128xbf16, #tpu.memory_space<vmem>>, %arg8: memref<512x128xbf16, #tpu.memory_space<vmem>>) attributes {dimension_semantics = [#tpu.dimension_semantics<parallel>], iteration_bounds = array<i64: 1>, scalar_prefetch = 0 : i64, scratch_operands = 0 : i64, tpu.core_type = #tpu.core_type<tc>, window_params = [{transform_indices = @transform_0, window_bounds = array<i64: 512, 128>}, {pipeline_mode = #tpu.pipeline_mode<synchronous>, transform_indices = @transform_1, window_bounds = array<i64: 128, 128>}, {pipeline_mode = #tpu.pipeline_mode<synchronous>, transform_indices = @transform_2, window_bounds = array<i64: 1, 128>}, {pipeline_mode = #tpu.pipeline_mode<synchronous>, transform_indices = @transform_3, window_bounds = array<i64: 1, 128>}, {pipeline_mode = #tpu.pipeline_mode<synchronous>, transform_indices = @transform_4, window_bounds = array<i64: 128, 128>}, {pipeline_mode = #tpu.pipeline_mode<synchronous>, transform_indices = @transform_5, window_bounds = array<i64: 1, 128>}, {transform_indices = @transform_6, window_bounds = array<i64: 512, 128>}, {transform_indices = @transform_7, window_bounds = array<i64: 512, 128>}]} {
    %c0 = arith.constant 0 : index
    %c0_0 = arith.constant 0 : index
    %0 = vector.load %arg1[%c0, %c0_0] : memref<512x128xbf16, #tpu.memory_space<vmem>>, vector<512x128xbf16>
    %c0_1 = arith.constant 0 : index
    %c0_2 = arith.constant 0 : index
    %1 = vector.load %arg2[%c0_1, %c0_2] : memref<128x128xbf16, #tpu.memory_space<vmem>>, vector<128x128xbf16>
    %cst = arith.constant dense<0.000000e+00> : vector<512x128xf32>
    %2 = tpu.matmul %0, %1, %cst {dimension_numbers = #tpu.dot_dimension_numbers<[1], [0], [0], [1], [0, 0, 1, 1], [], []>} : vector<512x128xbf16>, vector<128x128xbf16>, vector<512x128xf32> -> vector<512x128xf32>
    %c0_3 = arith.constant 0 : index
    %c0_4 = arith.constant 0 : index
    %3 = vector.load %arg3[%c0_3, %c0_4] : memref<1x128xf32, #tpu.memory_space<vmem>>, vector<1x128xf32>
    %4 = vector.broadcast %3 : vector<1x128xf32> to vector<512x128xf32>
    %5 = arith.mulf %2, %4 : vector<512x128xf32>
    %c0_5 = arith.constant 0 : index
    %c0_6 = arith.constant 0 : index
    %6 = vector.load %arg4[%c0_5, %c0_6] : memref<1x128xf32, #tpu.memory_space<vmem>>, vector<1x128xf32>
    %7 = vector.broadcast %6 : vector<1x128xf32> to vector<512x128xf32>
    %8 = arith.addf %5, %7 : vector<512x128xf32>
    %9 = arith.negf %8 : vector<512x128xf32>
    %10 = math.exp %9 : vector<512x128xf32>
    %cst_7 = arith.constant 1.000000e+00 : f32
    %11 = vector.broadcast %cst_7 : f32 to vector<512x128xf32>
    %12 = arith.addf %11, %10 : vector<512x128xf32>
    %13 = arith.divf %11, %12 : vector<512x128xf32>
    %14 = arith.mulf %8, %13 : vector<512x128xf32>
    %15 = arith.truncf %14 : vector<512x128xf32> to vector<512x128xbf16>
    %c0_8 = arith.constant 0 : index
    %c0_9 = arith.constant 0 : index
    %16 = vector.load %arg7[%c0_8, %c0_9] : memref<512x128xbf16, #tpu.memory_space<vmem>>, vector<512x128xbf16>
    tpu.vector_store %arg7[%c0_8, %c0_9], %15 {strides = array<i32>} : memref<512x128xbf16, #tpu.memory_space<vmem>>, vector<512x128xbf16>,
    %c0_10 = arith.constant 0 : index
    %c0_11 = arith.constant 0 : index
    %17 = vector.load %arg5[%c0_10, %c0_11] : memref<128x128xbf16, #tpu.memory_space<vmem>>, vector<128x128xbf16>
    %cst_12 = arith.constant dense<0.000000e+00> : vector<512x128xf32>
    %18 = tpu.matmul %0, %17, %cst_12 {dimension_numbers = #tpu.dot_dimension_numbers<[1], [0], [0], [1], [0, 0, 1, 1], [], []>} : vector<512x128xbf16>, vector<128x128xbf16>, vector<512x128xf32> -> vector<512x128xf32>
    %c0_13 = arith.constant 0 : index
    %c0_14 = arith.constant 0 : index
    %19 = vector.load %arg6[%c0_13, %c0_14] : memref<1x128xf32, #tpu.memory_space<vmem>>, vector<1x128xf32>
    %20 = vector.broadcast %19 : vector<1x128xf32> to vector<512x128xf32>
    %21 = arith.addf %18, %20 : vector<512x128xf32>
    %22 = arith.truncf %21 : vector<512x128xf32> to vector<512x128xbf16>
    %c0_15 = arith.constant 0 : index
    %c0_16 = arith.constant 0 : index
    %23 = vector.load %arg8[%c0_15, %c0_16] : memref<512x128xbf16, #tpu.memory_space<vmem>>, vector<512x128xbf16>
    tpu.vector_store %arg8[%c0_15, %c0_16], %22 {strides = array<i32>} : memref<512x128xbf16, #tpu.memory_space<vmem>>, vector<512x128xbf16>,
    return
  }
  func.func @transform_0(%arg0: i32) -> (i32, i32) {
    %c0_i32 = arith.constant 0 : i32
    %c0_i32_0 = arith.constant 0 : i32
    return %arg0, %c0_i32 : i32, i32
  }
  func.func @transform_1(%arg0: i32) -> (i32, i32) {
    %c0_i32 = arith.constant 0 : i32
    %c0_i32_0 = arith.constant 0 : i32
    %c0_i32_1 = arith.constant 0 : i32
    return %c0_i32, %c0_i32_0 : i32, i32
  }
  func.func @transform_2(%arg0: i32) -> (i32, i32) {
    %c0_i32 = arith.constant 0 : i32
    %c0_i32_0 = arith.constant 0 : i32
    %c0_i32_1 = arith.constant 0 : i32
    return %c0_i32, %c0_i32_0 : i32, i32
  }
  func.func @transform_3(%arg0: i32) -> (i32, i32) {
    %c0_i32 = arith.constant 0 : i32
    %c0_i32_0 = arith.constant 0 : i32
    %c0_i32_1 = arith.constant 0 : i32
    return %c0_i32, %c0_i32_0 : i32, i32
  }
  func.func @transform_4(%arg0: i32) -> (i32, i32) {
    %c0_i32 = arith.constant 0 : i32
    %c0_i32_0 = arith.constant 0 : i32
    %c0_i32_1 = arith.constant 0 : i32
    return %c0_i32, %c0_i32_0 : i32, i32
  }
  func.func @transform_5(%arg0: i32) -> (i32, i32) {
    %c0_i32 = arith.constant 0 : i32
    %c0_i32_0 = arith.constant 0 : i32
    %c0_i32_1 = arith.constant 0 : i32
    return %c0_i32, %c0_i32_0 : i32, i32
  }
  func.func @transform_6(%arg0: i32) -> (i32, i32) {
    %c0_i32 = arith.constant 0 : i32
    %c0_i32_0 = arith.constant 0 : i32
    return %arg0, %c0_i32 : i32, i32
  }
  func.func @transform_7(%arg0: i32) -> (i32, i32) {
    %c0_i32 = arith.constant 0 : i32
    %c0_i32_0 = arith.constant 0 : i32
    return %arg0, %c0_i32 : i32, i32
  }
}

</mosaic_0001>

<llo_original>
// kernel: tpu_custom_call.1
$region0: #{tpu_custom_call.1}
  #allocation0 [shape = 'u32[]', space=smem, size = 0x4, offset = 0x4, fixed_abs, tag = 'smem constant byte address 0x4 - core index']
  #allocation1 [shape = 'u32[144,128]{1,0:T(1,128)}', space=vmem, size = 0x12000, scoped, tag = 'internal scratch']
  %s0 = inlined_call_operand.hbm [shape: bf16[512,128], index: 0, kind: input, shape index: {}]
  %s1 = inlined_call_operand.hbm [shape: bf16[128,128], index: 1, kind: input, shape index: {}]
  %s2 = inlined_call_operand.vmem [shape: f32[1,128], index: 2, kind: input, shape index: {}]
  %s3 = inlined_call_operand.vmem [shape: f32[1,128], index: 3, kind: input, shape index: {}]
  %s4 = inlined_call_operand.hbm [shape: bf16[128,128], index: 4, kind: input, shape index: {}]
  %s5 = inlined_call_operand.vmem [shape: f32[1,128], index: 5, kind: input, shape index: {}]
  %s6 = inlined_call_operand.hbm [shape: bf16[512,128], index: 6, kind: output, shape index: {0}]
  %s7 = inlined_call_operand.hbm [shape: bf16[512,128], index: 7, kind: output, shape index: {1}]
  %8 = xla_tuple %s6, %s7
  %s9 = sld [smem:[#allocation0]]
  $region54: #{tpu_custom_call.1} parent=0
    _
  %s11 = ssub.s32 1, %s9
  %s12 = scalar_select 0, %s11, %s9
  $region1: #{tpu_custom_call.1} parent=0
    #allocation2 [shape = 'u8[131072]{0}', space=vmem, size = 0x20000, scoped, tag = 'input window, operand 0, single buffered']
    #allocation3 [shape = 's32[1]{0}', space=sflag, size = 0x4, scoped, tag = 'scoped memory for tpu_custom_call.1']
    #allocation4 [shape = 's32[1]{0}', space=sflag, size = 0x4, scoped, tag = 'scoped memory for tpu_custom_call.1']
    #allocation5 [shape = 'u8[32768]{0}', space=vmem, size = 0x8000, scoped, tag = 'input window, operand 1, single buffered']
    #allocation6 [shape = 's32[1]{0}', space=sflag, size = 0x4, scoped, tag = 'scoped memory for tpu_custom_call.1']
    #allocation7 [shape = 'u8[32768]{0}', space=vmem, size = 0x8000, scoped, tag = 'input window, operand 4, single buffered']
    #allocation8 [shape = 'u8[131072]{0}', space=vmem, size = 0x20000, scoped, tag = 'output window, operand 0, single buffered']
    #allocation9 [shape = 'u8[131072]{0}', space=vmem, size = 0x20000, scoped, tag = 'output window, operand 1, single buffered']
    #allocation10 [shape = 's32[1]{0}', space=sflag, size = 0x4, scoped, tag = 'scoped memory for tpu_custom_call.1']
    %13 = vsyncpa [#allocation3], 0
    %14 = vsyncpa [#allocation6], 0
    %15 = vsyncpa [#allocation4], 0
    %16 = vsyncpa [#allocation10], 0
    // Predicated region
    $region2: #{tpu_custom_call.1} parent=1 // pred_check
      _
    $region3: #{tpu_custom_call.1} parent=1 // pred_check_branch
      %18 = sbr.rel (0) target = $region5
    $region4: #{tpu_custom_call.1} parent=1 // pred_region
      %s20 = ssub.s32 4096, 4096
      %21 = vsyncadd [#allocation3], %s20
      %s22 = sshll.u32 [#allocation2], 4
      %s23 = int_to_ptr.vmem [resolvable:$true] %s22
      %28 = dma.hbm_to_vmem [thread:$0]  %s0, 4096, %s23, [#allocation3], 64, 64, 4
    $region5: #{tpu_custom_call.1} parent=1 // pred_fallthru
      _
    // Predicated region
    $region6: #{tpu_custom_call.1} parent=1 // pred_check
      _
    $region7: #{tpu_custom_call.1} parent=1 // pred_check_branch
      %30 = sbr.rel (0) target = $region9
    $region8: #{tpu_custom_call.1} parent=1 // pred_region
      %s32 = ssub.s32 1024, 1024
      %33 = vsyncadd [#allocation6], %s32
      %s34 = sshll.u32 [#allocation5], 4
      %s35 = int_to_ptr.vmem [resolvable:$true] %s34
      %40 = dma.hbm_to_vmem [thread:$0]  %s1, 1024, %s35, [#allocation6], 64, 64, 4
    $region9: #{tpu_custom_call.1} parent=1 // pred_fallthru
      _
    // Predicated region
    $region10: #{tpu_custom_call.1} parent=1 // pred_check
      _
    $region11: #{tpu_custom_call.1} parent=1 // pred_check_branch
      %42 = sbr.rel (0) target = $region13
    $region12: #{tpu_custom_call.1} parent=1 // pred_region
      _
    $region13: #{tpu_custom_call.1} parent=1 // pred_fallthru
      _
    // Predicated region
    $region14: #{tpu_custom_call.1} parent=1 // pred_check
      _
    $region15: #{tpu_custom_call.1} parent=1 // pred_check_branch
      %44 = sbr.rel (0) target = $region17
    $region16: #{tpu_custom_call.1} parent=1 // pred_region
      _
    $region17: #{tpu_custom_call.1} parent=1 // pred_fallthru
      _
    // Predicated region
    $region18: #{tpu_custom_call.1} parent=1 // pred_check
      _
    $region19: #{tpu_custom_call.1} parent=1 // pred_check_branch
      %46 = sbr.rel (0) target = $region21
    $region20: #{tpu_custom_call.1} parent=1 // pred_region
      %s48 = ssub.s32 1024, 1024
      %49 = vsyncadd [#allocation6], %s48
      %s50 = sshll.u32 [#allocation7], 4
      %s51 = int_to_ptr.vmem [resolvable:$true] %s50
      %56 = dma.hbm_to_vmem [thread:$0]  %s4, 1024, %s51, [#allocation6], 64, 64, 4
    $region21: #{tpu_custom_call.1} parent=1 // pred_fallthru
      _
    // Predicated region
    $region22: #{tpu_custom_call.1} parent=1 // pred_check
      _
    $region23: #{tpu_custom_call.1} parent=1 // pred_check_branch
      %58 = sbr.rel (0) target = $region25
    $region24: #{tpu_custom_call.1} parent=1 // pred_region
      _
    $region25: #{tpu_custom_call.1} parent=1 // pred_fallthru
      _
    // Predicated region
    $region26: #{tpu_custom_call.1} parent=1 // pred_check
      _
    $region27: #{tpu_custom_call.1} parent=1 // pred_check_branch
      %60 = sbr.rel (0) target = $region29
    $region28: #{tpu_custom_call.1} parent=1 // pred_region
      %61 = dma.done [#allocation3], 4096
    $region29: #{tpu_custom_call.1} parent=1 // pred_fallthru
      _
    // Predicated region
    $region30: #{tpu_custom_call.1} parent=1 // pred_check
      _
    $region31: #{tpu_custom_call.1} parent=1 // pred_check_branch
      %63 = sbr.rel (0) target = $region33
    $region32: #{tpu_custom_call.1} parent=1 // pred_region
      %64 = dma.done [#allocation6], 1024
    $region33: #{tpu_custom_call.1} parent=1 // pred_fallthru
      _
    // Predicated region
    $region34: #{tpu_custom_call.1} parent=1 // pred_check
      _
    $region35: #{tpu_custom_call.1} parent=1 // pred_check_branch
      %66 = sbr.rel (0) target = $region37
    $region36: #{tpu_custom_call.1} parent=1 // pred_region
      %67 = dma.done [#allocation6], 1024
    $region37: #{tpu_custom_call.1} parent=1 // pred_fallthru
      _
    %v69 = vld [vmem:[#allocation2] sm:$0xf]
    %v70 = vld [vmem:[#allocation2 + $0x4] sm:$0xf]
    %v71 = vld [vmem:[#allocation2 + $0x8] sm:$0xf]
    %v72 = vld [vmem:[#allocation2 + $0xc] sm:$0xf]
    %v73 = vld [vmem:[#allocation2 + $0x10] sm:$0xf]
    %v74 = vld [vmem:[#allocation2 + $0x14] sm:$0xf]
    %v75 = vld [vmem:[#allocation2 + $0x18] sm:$0xf]
    %v76 = vld [vmem:[#allocation2 + $0x1c] sm:$0xf]
    %v77 = vld [vmem:[#allocation2 + $0x20] sm:$0xf]
    %v78 = vld [vmem:[#allocation2 + $0x24] sm:$0xf]
    %v79 = vld [vmem:[#allocation2 + $0x28] sm:$0xf]
    %v80 = vld [vmem:[#allocation2 + $0x2c] sm:$0xf]
    %v81 = vld [vmem:[#allocation2 + $0x30] sm:$0xf]
    %v82 = vld [vmem:[#allocation2 + $0x34] sm:$0xf]
    %v83 = vld [vmem:[#allocation2 + $0x38] sm:$0xf]
    %v84 = vld [vmem:[#allocation2 + $0x3c] sm:$0xf]
    %v85 = vld [vmem:[#allocation2 + $0x40] sm:$0xf]
    %v86 = vld [vmem:[#allocation2 + $0x44] sm:$0xf]
    %v87 = vld [vmem:[#allocation2 + $0x48] sm:$0xf]
    %v88 = vld [vmem:[#allocation2 + $0x4c] sm:$0xf]
    %v89 = vld [vmem:[#allocation2 + $0x50] sm:$0xf]
    %v90 = vld [vmem:[#allocation2 + $0x54] sm:$0xf]
    %v91 = vld [vmem:[#allocation2 + $0x58] sm:$0xf]
    %v92 = vld [vmem:[#allocation2 + $0x5c] sm:$0xf]
    %v93 = vld [vmem:[#allocation2 + $0x60] sm:$0xf]
    %v94 = vld [vmem:[#allocation2 + $0x64] sm:$0xf]
    %v95 = vld [vmem:[#allocation2 + $0x68] sm:$0xf]
    %v96 = vld [vmem:[#allocation2 + $0x6c] sm:$0xf]
    %v97 = vld [vmem:[#allocation2 + $0x70] sm:$0xf]
    %v98 = vld [vmem:[#allocation2 + $0x74] sm:$0xf]
    %v99 = vld [vmem:[#allocation2 + $0x78] sm:$0xf]
    %v100 = vld [vmem:[#allocation2 + $0x7c] sm:$0xf]
    %v101 = vld [vmem:[#allocation2 + $0x80] sm:$0xf]
    %v102 = vld [vmem:[#allocation2 + $0x84] sm:$0xf]
    %v103 = vld [vmem:[#allocation2 + $0x88] sm:$0xf]
    %v104 = vld [vmem:[#allocation2 + $0x8c] sm:$0xf]
    %v105 = vld [vmem:[#allocation2 + $0x90] sm:$0xf]
    %v106 = vld [vmem:[#allocation2 + $0x94] sm:$0xf]
    %v107 = vld [vmem:[#allocation2 + $0x98] sm:$0xf]
    %v108 = vld [vmem:[#allocation2 + $0x9c] sm:$0xf]
    %v109 = vld [vmem:[#allocation2 + $0xa0] sm:$0xf]
    %v110 = vld [vmem:[#allocation2 + $0xa4] sm:$0xf]
    %v111 = vld [vmem:[#allocation2 + $0xa8] sm:$0xf]
    %v112 = vld [vmem:[#allocation2 + $0xac] sm:$0xf]
    %v113 = vld [vmem:[#allocation2 + $0xb0] sm:$0xf]
    %v114 = vld [vmem:[#allocation2 + $0xb4] sm:$0xf]
    %v115 = vld [vmem:[#allocation2 + $0xb8] sm:$0xf]
    %v116 = vld [vmem:[#allocation2 + $0xbc] sm:$0xf]
    %v117 = vld [vmem:[#allocation2 + $0xc0] sm:$0xf]
    %v118 = vld [vmem:[#allocation2 + $0xc4] sm:$0xf]
    %v119 = vld [vmem:[#allocation2 + $0xc8] sm:$0xf]
    %v120 = vld [vmem:[#allocation2 + $0xcc] sm:$0xf]
    %v121 = vld [vmem:[#allocation2 + $0xd0] sm:$0xf]
    %v122 = vld [vmem:[#allocation2 + $0xd4] sm:$0xf]
    %v123 = vld [vmem:[#allocation2 + $0xd8] sm:$0xf]
    %v124 = vld [vmem:[#allocation2 + $0xdc] sm:$0xf]
    %v125 = vld [vmem:[#allocation2 + $0xe0] sm:$0xf]
    %v126 = vld [vmem:[#allocation2 + $0xe4] sm:$0xf]
    %v127 = vld [vmem:[#allocation2 + $0xe8] sm:$0xf]
    %v128 = vld [vmem:[#allocation2 + $0xec] sm:$0xf]
    %v129 = vld [vmem:[#allocation2 + $0xf0] sm:$0xf]
    %v130 = vld [vmem:[#allocation2 + $0xf4] sm:$0xf]
    %v131 = vld [vmem:[#allocation2 + $0xf8] sm:$0xf]
    %v132 = vld [vmem:[#allocation2 + $0xfc] sm:$0xf]
    %v133 = vld [vmem:[#allocation5] sm:$0xf]
    %v134 = vld [vmem:[#allocation5 + $0x4] sm:$0xf]
    %v135 = vld [vmem:[#allocation5 + $0x8] sm:$0xf]
    %v136 = vld [vmem:[#allocation5 + $0xc] sm:$0xf]
    %v137 = vld [vmem:[#allocation5 + $0x10] sm:$0xf]
    %v138 = vld [vmem:[#allocation5 + $0x14] sm:$0xf]
    %v139 = vld [vmem:[#allocation5 + $0x18] sm:$0xf]
    %v140 = vld [vmem:[#allocation5 + $0x1c] sm:$0xf]
    %v141 = vld [vmem:[#allocation5 + $0x20] sm:$0xf]
    %v142 = vld [vmem:[#allocation5 + $0x24] sm:$0xf]
    %v143 = vld [vmem:[#allocation5 + $0x28] sm:$0xf]
    %v144 = vld [vmem:[#allocation5 + $0x2c] sm:$0xf]
    %v145 = vld [vmem:[#allocation5 + $0x30] sm:$0xf]
    %v146 = vld [vmem:[#allocation5 + $0x34] sm:$0xf]
    %v147 = vld [vmem:[#allocation5 + $0x38] sm:$0xf]
    %v148 = vld [vmem:[#allocation5 + $0x3c] sm:$0xf]
    %v213 = vunpack.c.l.b16 %v69
    %v214 = vunpack.c.l.b16 %v70
    %v215 = vunpack.c.l.b16 %v71
    %v216 = vunpack.c.l.b16 %v72
    %v217 = vunpack.c.l.b16 %v73
    %v218 = vunpack.c.l.b16 %v74
    %v219 = vunpack.c.l.b16 %v75
    %v220 = vunpack.c.l.b16 %v76
    %v221 = vunpack.c.l.b16 %v77
    %v222 = vunpack.c.l.b16 %v78
    %v223 = vunpack.c.l.b16 %v79
    %v224 = vunpack.c.l.b16 %v80
    %v225 = vunpack.c.l.b16 %v81
    %v226 = vunpack.c.l.b16 %v82
    %v227 = vunpack.c.l.b16 %v83
    %v228 = vunpack.c.l.b16 %v84
    %v229 = vunpack.c.l.b16 %v85
    %v230 = vunpack.c.l.b16 %v86
    %v231 = vunpack.c.l.b16 %v87
    %v232 = vunpack.c.l.b16 %v88
    %v233 = vunpack.c.l.b16 %v89
    %v234 = vunpack.c.l.b16 %v90
    %v235 = vunpack.c.l.b16 %v91
    %v236 = vunpack.c.l.b16 %v92
    %v237 = vunpack.c.l.b16 %v93
    %v238 = vunpack.c.l.b16 %v94
    %v239 = vunpack.c.l.b16 %v95
    %v240 = vunpack.c.l.b16 %v96
    %v241 = vunpack.c.l.b16 %v97
    %v242 = vunpack.c.l.b16 %v98
    %v243 = vunpack.c.l.b16 %v99
    %v244 = vunpack.c.l.b16 %v100
    %v245 = vunpack.c.l.b16 %v101
    %v246 = vunpack.c.l.b16 %v102
    %v247 = vunpack.c.l.b16 %v103
    %v248 = vunpack.c.l.b16 %v104
    %v249 = vunpack.c.l.b16 %v105
    %v250 = vunpack.c.l.b16 %v106
    %v251 = vunpack.c.l.b16 %v107
    %v252 = vunpack.c.l.b16 %v108
    %v253 = vunpack.c.l.b16 %v109
    %v254 = vunpack.c.l.b16 %v110
    %v255 = vunpack.c.l.b16 %v111
    %v256 = vunpack.c.l.b16 %v112
    %v257 = vunpack.c.l.b16 %v113
    %v258 = vunpack.c.l.b16 %v114
    %v259 = vunpack.c.l.b16 %v115
    %v260 = vunpack.c.l.b16 %v116
    %v261 = vunpack.c.l.b16 %v117
    %v262 = vunpack.c.l.b16 %v118
    %v263 = vunpack.c.l.b16 %v119
    %v264 = vunpack.c.l.b16 %v120
    %v265 = vunpack.c.l.b16 %v121
    %v266 = vunpack.c.l.b16 %v122
    %v267 = vunpack.c.l.b16 %v123
    %v268 = vunpack.c.l.b16 %v124
    %v269 = vunpack.c.l.b16 %v125
    %v270 = vunpack.c.l.b16 %v126
    %v271 = vunpack.c.l.b16 %v127
    %v272 = vunpack.c.l.b16 %v128
    %v273 = vunpack.c.l.b16 %v129
    %v274 = vunpack.c.l.b16 %v130
    %v275 = vunpack.c.l.b16 %v131
    %v276 = vunpack.c.l.b16 %v132
    %v277 = vpack.c.b16 %v214, %v213
    %v278 = vpack.c.b16 %v216, %v215
    %v279 = vpack.c.b16 %v218, %v217
    %v280 = vpack.c.b16 %v220, %v219
    %v281 = vpack.c.b16 %v222, %v221
    %v282 = vpack.c.b16 %v224, %v223
    %v283 = vpack.c.b16 %v226, %v225
    %v284 = vpack.c.b16 %v228, %v227
    %v285 = vpack.c.b16 %v230, %v229
    %v286 = vpack.c.b16 %v232, %v231
    %v287 = vpack.c.b16 %v234, %v233
    %v288 = vpack.c.b16 %v236, %v235
    %v289 = vpack.c.b16 %v238, %v237
    %v290 = vpack.c.b16 %v240, %v239
    %v291 = vpack.c.b16 %v242, %v241
    %v292 = vpack.c.b16 %v244, %v243
    %v293 = vpack.c.b16 %v246, %v245
    %v294 = vpack.c.b16 %v248, %v247
    %v295 = vpack.c.b16 %v250, %v249
    %v296 = vpack.c.b16 %v252, %v251
    %v297 = vpack.c.b16 %v254, %v253
    %v298 = vpack.c.b16 %v256, %v255
    %v299 = vpack.c.b16 %v258, %v257
    %v300 = vpack.c.b16 %v260, %v259
    %v301 = vpack.c.b16 %v262, %v261
    %v302 = vpack.c.b16 %v264, %v263
    %v303 = vpack.c.b16 %v266, %v265
    %v304 = vpack.c.b16 %v268, %v267
    %v305 = vpack.c.b16 %v270, %v269
    %v306 = vpack.c.b16 %v272, %v271
    %v307 = vpack.c.b16 %v274, %v273
    %v308 = vpack.c.b16 %v276, %v275
    %v357 = vunpack.c.l.b16 %v133
    %v358 = vunpack.c.l.b16 %v134
    %v359 = vunpack.c.l.b16 %v135
    %v360 = vunpack.c.l.b16 %v136
    %v361 = vunpack.c.l.b16 %v137
    %v362 = vunpack.c.l.b16 %v138
    %v363 = vunpack.c.l.b16 %v139
    %v364 = vunpack.c.l.b16 %v140
    %v365 = vunpack.c.l.b16 %v141
    %v366 = vunpack.c.l.b16 %v142
    %v367 = vunpack.c.l.b16 %v143
    %v368 = vunpack.c.l.b16 %v144
    %v369 = vunpack.c.l.b16 %v145
    %v370 = vunpack.c.l.b16 %v146
    %v371 = vunpack.c.l.b16 %v147
    %v372 = vunpack.c.l.b16 %v148
    %v373 = vpack.c.b16 %v358, %v357
    %v374 = vpack.c.b16 %v360, %v359
    %v375 = vpack.c.b16 %v362, %v361
    %v376 = vpack.c.b16 %v364, %v363
    %v377 = vpack.c.b16 %v366, %v365
    %v378 = vpack.c.b16 %v368, %v367
    %v379 = vpack.c.b16 %v370, %v369
    %v380 = vpack.c.b16 %v372, %v371
    %389 = vmatprep.subr.bf16.mxu0 0
    %390 = vmatpush1.bf16.msra.mxu0 %v373
    %391 = vmatprep.subr.bf16.mxu0 0
    %392 = vmatpush1.bf16.msra.mxu0 %v374
    %393 = vmatprep.subr.bf16.mxu0 0
    %394 = vmatpush1.bf16.msra.mxu0 %v375
    %395 = vmatprep.subr.bf16.mxu0 0
    %396 = vmatpush1.bf16.msra.mxu0 %v376
    %397 = vmatprep.subr.bf16.mxu0 0
    %398 = vmatpush1.bf16.msra.mxu0 %v377
    %399 = vmatprep.subr.bf16.mxu0 0
    %400 = vmatpush1.bf16.msra.mxu0 %v378
    %401 = vmatprep.subr.bf16.mxu0 0
    %402 = vmatpush1.bf16.msra.mxu0 %v379
    %403 = vmatprep.subr.bf16.mxu0 0
    %404 = vmatpush1.bf16.msra.mxu0 %v380
    %405 = vmatprep.subr.bf16.mxu0 0
    %406 = vmatpush1.bf16.msra.mxu0 0
    %407 = vmatprep.subr.bf16.mxu0 0
    %408 = vmatpush1.bf16.msra.mxu0 0
    %409 = vmatprep.subr.bf16.mxu0 0
    %410 = vmatpush1.bf16.msra.mxu0 0
    %411 = vmatprep.subr.bf16.mxu0 0
    %412 = vmatpush1.bf16.msra.mxu0 0
    %413 = vmatprep.subr.bf16.mxu0 0
    %414 = vmatpush1.bf16.msra.mxu0 0
    %415 = vmatprep.subr.bf16.mxu0 0
    %416 = vmatpush1.bf16.msra.mxu0 0
    %417 = vmatprep.subr.bf16.mxu0 0
    %418 = vmatpush1.bf16.msra.mxu0 0
    %419 = vmatprep.subr.bf16.mxu0 0
    %420 = vmatpush1.bf16.msra.mxu0 0
    %421 = vmatprep.mubr.bf16.mxu0 0
    %422 = vmatmul.mubr.bf16.gmra.mrb[0].mxu0 %v277
    %v423 = vpop.f32.mrb[0].mxu0
    %v424 = vadd.f32 0.0, %v423
    %v425 = vpop.f32.mrb[0].mxu0
    %v426 = vpop.f32.mrb[0].mxu0
    %v427 = vadd.f32 0.0, %v426
    %v428 = vpop.f32.mrb[0].mxu0
    %429 = vmatprep.mubr.bf16.mxu0 0
    %430 = vmatmul.mubr.bf16.gmra.mrb[0].mxu0 %v278
    %v431 = vpop.f32.mrb[0].mxu0
    %v432 = vadd.f32 0.0, %v431
    %v433 = vpop.f32.mrb[0].mxu0
    %v434 = vpop.f32.mrb[0].mxu0
    %v435 = vadd.f32 0.0, %v434
    %v436 = vpop.f32.mrb[0].mxu0
    %437 = vmatprep.mubr.bf16.mxu0 0
    %438 = vmatmul.mubr.bf16.gmra.mrb[0].mxu0 %v279
    %v439 = vpop.f32.mrb[0].mxu0
    %v440 = vadd.f32 0.0, %v439
    %v441 = vpop.f32.mrb[0].mxu0
    %v442 = vpop.f32.mrb[0].mxu0
    %v443 = vadd.f32 0.0, %v442
    %v444 = vpop.f32.mrb[0].mxu0
    %445 = vmatprep.mubr.bf16.mxu0 0
    %446 = vmatmul.mubr.bf16.gmra.mrb[0].mxu0 %v280
    %v447 = vpop.f32.mrb[0].mxu0
    %v448 = vadd.f32 0.0, %v447
    %v449 = vpop.f32.mrb[0].mxu0
    %v450 = vpop.f32.mrb[0].mxu0
    %v451 = vadd.f32 0.0, %v450
    %v452 = vpop.f32.mrb[0].mxu0
    %453 = vmatprep.mubr.bf16.mxu0 0
    %454 = vmatmul.mubr.bf16.gmra.mrb[0].mxu0 %v281
    %v455 = vpop.f32.mrb[0].mxu0
    %v456 = vadd.f32 0.0, %v455
    %v457 = vpop.f32.mrb[0].mxu0
    %v458 = vpop.f32.mrb[0].mxu0
    %v459 = vadd.f32 0.0, %v458
    %v460 = vpop.f32.mrb[0].mxu0
    %461 = vmatprep.mubr.bf16.mxu0 0
    %462 = vmatmul.mubr.bf16.gmra.mrb[0].mxu0 %v282
    %v463 = vpop.f32.mrb[0].mxu0
    %v464 = vadd.f32 0.0, %v463
    %v465 = vpop.f32.mrb[0].mxu0
    %v466 = vpop.f32.mrb[0].mxu0
    %v467 = vadd.f32 0.0, %v466
    %v468 = vpop.f32.mrb[0].mxu0
    %469 = vmatprep.mubr.bf16.mxu0 0
    %470 = vmatmul.mubr.bf16.gmra.mrb[0].mxu0 %v283
    %v471 = vpop.f32.mrb[0].mxu0
    %v472 = vadd.f32 0.0, %v471
    %v473 = vpop.f32.mrb[0].mxu0
    %v474 = vpop.f32.mrb[0].mxu0
    %v475 = vadd.f32 0.0, %v474
    %v476 = vpop.f32.mrb[0].mxu0
    %477 = vmatprep.mubr.bf16.mxu0 0
    %478 = vmatmul.mubr.bf16.gmra.mrb[0].mxu0 %v284
    %v479 = vpop.f32.mrb[0].mxu0
    %v480 = vadd.f32 0.0, %v479
    %v481 = vpop.f32.mrb[0].mxu0
    %v482 = vpop.f32.mrb[0].mxu0
    %v483 = vadd.f32 0.0, %v482
    %v484 = vpop.f32.mrb[0].mxu0
    %485 = vmatprep.mubr.bf16.mxu0 0
    %486 = vmatmul.mubr.bf16.gmra.mrb[0].mxu0 %v285
    %v487 = vpop.f32.mrb[0].mxu0
    %v488 = vadd.f32 0.0, %v487
    %v489 = vpop.f32.mrb[0].mxu0
    %v490 = vpop.f32.mrb[0].mxu0
    %v491 = vadd.f32 0.0, %v490
    %v492 = vpop.f32.mrb[0].mxu0
    %493 = vmatprep.mubr.bf16.mxu0 0
    %494 = vmatmul.mubr.bf16.gmra.mrb[0].mxu0 %v286
    %v495 = vpop.f32.mrb[0].mxu0
    %v496 = vadd.f32 0.0, %v495
    %v497 = vpop.f32.mrb[0].mxu0
    %v498 = vpop.f32.mrb[0].mxu0
    %v499 = vadd.f32 0.0, %v498
    %v500 = vpop.f32.mrb[0].mxu0
    %501 = vmatprep.mubr.bf16.mxu0 0
    %502 = vmatmul.mubr.bf16.gmra.mrb[0].mxu0 %v287
    %v503 = vpop.f32.mrb[0].mxu0
    %v504 = vadd.f32 0.0, %v503
    %v505 = vpop.f32.mrb[0].mxu0
    %v506 = vpop.f32.mrb[0].mxu0
    %v507 = vadd.f32 0.0, %v506
    %v508 = vpop.f32.mrb[0].mxu0
    %509 = vmatprep.mubr.bf16.mxu0 0
    %510 = vmatmul.mubr.bf16.gmra.mrb[0].mxu0 %v288
    %v511 = vpop.f32.mrb[0].mxu0
    %v512 = vadd.f32 0.0, %v511
    %v513 = vpop.f32.mrb[0].mxu0
    %v514 = vpop.f32.mrb[0].mxu0
    %v515 = vadd.f32 0.0, %v514
    %v516 = vpop.f32.mrb[0].mxu0
    %517 = vmatprep.mubr.bf16.mxu0 0
    %518 = vmatmul.mubr.bf16.gmra.mrb[0].mxu0 %v289
    %v519 = vpop.f32.mrb[0].mxu0
    %v520 = vadd.f32 0.0, %v519
    %v521 = vpop.f32.mrb[0].mxu0
    %v522 = vpop.f32.mrb[0].mxu0
    %v523 = vadd.f32 0.0, %v522
    %v524 = vpop.f32.mrb[0].mxu0
    %525 = vmatprep.mubr.bf16.mxu0 0
    %526 = vmatmul.mubr.bf16.gmra.mrb[0].mxu0 %v290
    %v527 = vpop.f32.mrb[0].mxu0
    %v528 = vadd.f32 0.0, %v527
    %v529 = vpop.f32.mrb[0].mxu0
    %v530 = vpop.f32.mrb[0].mxu0
    %v531 = vadd.f32 0.0, %v530
    %v532 = vpop.f32.mrb[0].mxu0
    %533 = vmatprep.mubr.bf16.mxu0 0
    %534 = vmatmul.mubr.bf16.gmra.mrb[0].mxu0 %v291
    %v535 = vpop.f32.mrb[0].mxu0
    %v536 = vadd.f32 0.0, %v535
    %v537 = vpop.f32.mrb[0].mxu0
    %v538 = vpop.f32.mrb[0].mxu0
    %v539 = vadd.f32 0.0, %v538
    %v540 = vpop.f32.mrb[0].mxu0
    %541 = vmatprep.mubr.bf16.mxu0 0
    %542 = vmatmul.mubr.bf16.gmra.mrb[0].mxu0 %v292
    %v543 = vpop.f32.mrb[0].mxu0
    %v544 = vadd.f32 0.0, %v543
    %v545 = vpop.f32.mrb[0].mxu0
    %v546 = vpop.f32.mrb[0].mxu0
    %v547 = vadd.f32 0.0, %v546
    %v548 = vpop.f32.mrb[0].mxu0
    %549 = vmatprep.mubr.bf16.mxu0 0
    %550 = vmatmul.mubr.bf16.gmra.mrb[0].mxu0 %v293
    %v551 = vpop.f32.mrb[0].mxu0
    %v552 = vadd.f32 0.0, %v551
    %v553 = vpop.f32.mrb[0].mxu0
    %v554 = vpop.f32.mrb[0].mxu0
    %v555 = vadd.f32 0.0, %v554
    %v556 = vpop.f32.mrb[0].mxu0
    %557 = vmatprep.mubr.bf16.mxu0 0
    %558 = vmatmul.mubr.bf16.gmra.mrb[0].mxu0 %v294
    %v559 = vpop.f32.mrb[0].mxu0
    %v560 = vadd.f32 0.0, %v559
    %v561 = vpop.f32.mrb[0].mxu0
    %v562 = vpop.f32.mrb[0].mxu0
    %v563 = vadd.f32 0.0, %v562
    %v564 = vpop.f32.mrb[0].mxu0
    %565 = vmatprep.mubr.bf16.mxu0 0
    %566 = vmatmul.mubr.bf16.gmra.mrb[0].mxu0 %v295
    %v567 = vpop.f32.mrb[0].mxu0
    %v568 = vadd.f32 0.0, %v567
    %v569 = vpop.f32.mrb[0].mxu0
    %v570 = vpop.f32.mrb[0].mxu0
    %v571 = vadd.f32 0.0, %v570
    %v572 = vpop.f32.mrb[0].mxu0
    %573 = vmatprep.mubr.bf16.mxu0 0
    %574 = vmatmul.mubr.bf16.gmra.mrb[0].mxu0 %v296
    %v575 = vpop.f32.mrb[0].mxu0
    %v576 = vadd.f32 0.0, %v575
    %v577 = vpop.f32.mrb[0].mxu0
    %v578 = vpop.f32.mrb[0].mxu0
    %v579 = vadd.f32 0.0, %v578
    %v580 = vpop.f32.mrb[0].mxu0
    %581 = vmatprep.mubr.bf16.mxu0 0
    %582 = vmatmul.mubr.bf16.gmra.mrb[0].mxu0 %v297
    %v583 = vpop.f32.mrb[0].mxu0
    %v584 = vadd.f32 0.0, %v583
    %v585 = vpop.f32.mrb[0].mxu0
    %v586 = vpop.f32.mrb[0].mxu0
    %v587 = vadd.f32 0.0, %v586
    %v588 = vpop.f32.mrb[0].mxu0
    %589 = vmatprep.mubr.bf16.mxu0 0
    %590 = vmatmul.mubr.bf16.gmra.mrb[0].mxu0 %v298
    %v591 = vpop.f32.mrb[0].mxu0
    %v592 = vadd.f32 0.0, %v591
    %v593 = vpop.f32.mrb[0].mxu0
    %v594 = vpop.f32.mrb[0].mxu0
    %v595 = vadd.f32 0.0, %v594
    %v596 = vpop.f32.mrb[0].mxu0
    %597 = vmatprep.mubr.bf16.mxu0 0
    %598 = vmatmul.mubr.bf16.gmra.mrb[0].mxu0 %v299
    %v599 = vpop.f32.mrb[0].mxu0
    %v600 = vadd.f32 0.0, %v599
    %v601 = vpop.f32.mrb[0].mxu0
    %v602 = vpop.f32.mrb[0].mxu0
    %v603 = vadd.f32 0.0, %v602
    %v604 = vpop.f32.mrb[0].mxu0
    %605 = vmatprep.mubr.bf16.mxu0 0
    %606 = vmatmul.mubr.bf16.gmra.mrb[0].mxu0 %v300
    %v607 = vpop.f32.mrb[0].mxu0
    %v608 = vadd.f32 0.0, %v607
    %v609 = vpop.f32.mrb[0].mxu0
    %v610 = vpop.f32.mrb[0].mxu0
    %v611 = vadd.f32 0.0, %v610
    %v612 = vpop.f32.mrb[0].mxu0
    %613 = vmatprep.mubr.bf16.mxu0 0
    %614 = vmatmul.mubr.bf16.gmra.mrb[0].mxu0 %v301
    %v615 = vpop.f32.mrb[0].mxu0
    %v616 = vadd.f32 0.0, %v615
    %v617 = vpop.f32.mrb[0].mxu0
    %v618 = vpop.f32.mrb[0].mxu0
    %v619 = vadd.f32 0.0, %v618
    %v620 = vpop.f32.mrb[0].mxu0
    %621 = vmatprep.mubr.bf16.mxu0 0
    %622 = vmatmul.mubr.bf16.gmra.mrb[0].mxu0 %v302
    %v623 = vpop.f32.mrb[0].mxu0
    %v624 = vadd.f32 0.0, %v623
    %v625 = vpop.f32.mrb[0].mxu0
    %v626 = vpop.f32.mrb[0].mxu0
    %v627 = vadd.f32 0.0, %v626
    %v628 = vpop.f32.mrb[0].mxu0
    %629 = vmatprep.mubr.bf16.mxu0 0
    %630 = vmatmul.mubr.bf16.gmra.mrb[0].mxu0 %v303
    %v631 = vpop.f32.mrb[0].mxu0
    %v632 = vadd.f32 0.0, %v631
    %v633 = vpop.f32.mrb[0].mxu0
    %v634 = vpop.f32.mrb[0].mxu0
    %v635 = vadd.f32 0.0, %v634
    %v636 = vpop.f32.mrb[0].mxu0
    %637 = vmatprep.mubr.bf16.mxu0 0
    %638 = vmatmul.mubr.bf16.gmra.mrb[0].mxu0 %v304
    %v639 = vpop.f32.mrb[0].mxu0
    %v640 = vadd.f32 0.0, %v639
    %v641 = vpop.f32.mrb[0].mxu0
    %v642 = vpop.f32.mrb[0].mxu0
    %v643 = vadd.f32 0.0, %v642
    %v644 = vpop.f32.mrb[0].mxu0
    %645 = vmatprep.mubr.bf16.mxu0 0
    %646 = vmatmul.mubr.bf16.gmra.mrb[0].mxu0 %v305
    %v647 = vpop.f32.mrb[0].mxu0
    %v648 = vadd.f32 0.0, %v647
    %v649 = vpop.f32.mrb[0].mxu0
    %v650 = vpop.f32.mrb[0].mxu0
    %v651 = vadd.f32 0.0, %v650
    %v652 = vpop.f32.mrb[0].mxu0
    %653 = vmatprep.mubr.bf16.mxu0 0
    %654 = vmatmul.mubr.bf16.gmra.mrb[0].mxu0 %v306
    %v655 = vpop.f32.mrb[0].mxu0
    %v656 = vadd.f32 0.0, %v655
    %v657 = vpop.f32.mrb[0].mxu0
    %v658 = vpop.f32.mrb[0].mxu0
    %v659 = vadd.f32 0.0, %v658
    %v660 = vpop.f32.mrb[0].mxu0
    %661 = vmatprep.mubr.bf16.mxu0 0
    %662 = vmatmul.mubr.bf16.gmra.mrb[0].mxu0 %v307
    %v663 = vpop.f32.mrb[0].mxu0
    %v664 = vadd.f32 0.0, %v663
    %v665 = vpop.f32.mrb[0].mxu0
    %v666 = vpop.f32.mrb[0].mxu0
    %v667 = vadd.f32 0.0, %v666
    %v668 = vpop.f32.mrb[0].mxu0
    %669 = vmatprep.mubr.bf16.mxu0 0
    %670 = vmatmul.mubr.bf16.gmra.mrb[0].mxu0 %v308
    %v671 = vpop.f32.mrb[0].mxu0
    %v672 = vadd.f32 0.0, %v671
    %v673 = vpop.f32.mrb[0].mxu0
    %v674 = vpop.f32.mrb[0].mxu0
    %v675 = vadd.f32 0.0, %v674
    %v676 = vpop.f32.mrb[0].mxu0
    %677 = vdwg.mxu0
    %v678 = vld [vmem:[%s2] sm:$0x1]
    %v680 = vlaneseq
    %v681 = vshrl.u32 %v680, 7
    %v682 = vsub.s32 0, %v681
    %v683 = vrot.slane %v678, %v682
    %v685 = vmul.f32 %v424, %v683
    %v686 = vmul.f32 %v427, %v683
    %v687 = vmul.f32 %v432, %v683
    %v688 = vmul.f32 %v435, %v683
    %v689 = vmul.f32 %v440, %v683
    %v690 = vmul.f32 %v443, %v683
    %v691 = vmul.f32 %v448, %v683
    %v692 = vmul.f32 %v451, %v683
    %v693 = vmul.f32 %v456, %v683
    %v694 = vmul.f32 %v459, %v683
    %v695 = vmul.f32 %v464, %v683
    %v696 = vmul.f32 %v467, %v683
    %v697 = vmul.f32 %v472, %v683
    %v698 = vmul.f32 %v475, %v683
    %v699 = vmul.f32 %v480, %v683
    %v700 = vmul.f32 %v483, %v683
    %v701 = vmul.f32 %v488, %v683
    %v702 = vmul.f32 %v491, %v683
    %v703 = vmul.f32 %v496, %v683
    %v704 = vmul.f32 %v499, %v683
    %v705 = vmul.f32 %v504, %v683
    %v706 = vmul.f32 %v507, %v683
    %v707 = vmul.f32 %v512, %v683
    %v708 = vmul.f32 %v515, %v683
    %v709 = vmul.f32 %v520, %v683
    %v710 = vmul.f32 %v523, %v683
    %v711 = vmul.f32 %v528, %v683
    %v712 = vmul.f32 %v531, %v683
    %v713 = vmul.f32 %v536, %v683
    %v714 = vmul.f32 %v539, %v683
    %v715 = vmul.f32 %v544, %v683
    %v716 = vmul.f32 %v547, %v683
    %v717 = vmul.f32 %v552, %v683
    %v718 = vmul.f32 %v555, %v683
    %v719 = vmul.f32 %v560, %v683
    %v720 = vmul.f32 %v563, %v683
    %v721 = vmul.f32 %v568, %v683
    %v722 = vmul.f32 %v571, %v683
    %v723 = vmul.f32 %v576, %v683
    %v724 = vmul.f32 %v579, %v683
    %v725 = vmul.f32 %v584, %v683
    %v726 = vmul.f32 %v587, %v683
    %v727 = vmul.f32 %v592, %v683
    %v728 = vmul.f32 %v595, %v683
    %v729 = vmul.f32 %v600, %v683
    %v730 = vmul.f32 %v603, %v683
    %v731 = vmul.f32 %v608, %v683
    %v732 = vmul.f32 %v611, %v683
    %v733 = vmul.f32 %v616, %v683
    %v734 = vmul.f32 %v619, %v683
    %v735 = vmul.f32 %v624, %v683
    %v736 = vmul.f32 %v627, %v683
    %v737 = vmul.f32 %v632, %v683
    %v738 = vmul.f32 %v635, %v683
    %v739 = vmul.f32 %v640, %v683
    %v740 = vmul.f32 %v643, %v683
    %v741 = vmul.f32 %v648, %v683
    %v742 = vmul.f32 %v651, %v683
    %v743 = vmul.f32 %v656, %v683
    %v744 = vmul.f32 %v659, %v683
    %v745 = vmul.f32 %v664, %v683
    %v746 = vmul.f32 %v667, %v683
    %v747 = vmul.f32 %v672, %v683
    %v748 = vmul.f32 %v675, %v683
    %v749 = vld [vmem:[%s3] sm:$0x1]
    %v751 = vlaneseq
    %v752 = vshrl.u32 %v751, 7
    %v753 = vsub.s32 0, %v752
    %v754 = vrot.slane %v749, %v753
    %v756 = vadd.f32 %v685, %v754
    %v757 = vadd.f32 %v686, %v754
    %v758 = vadd.f32 %v687, %v754
    %v759 = vadd.f32 %v688, %v754
    %v760 = vadd.f32 %v689, %v754
    %v761 = vadd.f32 %v690, %v754
    %v762 = vadd.f32 %v691, %v754
    %v763 = vadd.f32 %v692, %v754
    %v764 = vadd.f32 %v693, %v754
    %v765 = vadd.f32 %v694, %v754
    %v766 = vadd.f32 %v695, %v754
    %v767 = vadd.f32 %v696, %v754
    %v768 = vadd.f32 %v697, %v754
    %v769 = vadd.f32 %v698, %v754
    %v770 = vadd.f32 %v699, %v754
    %v771 = vadd.f32 %v700, %v754
    %v772 = vadd.f32 %v701, %v754
    %v773 = vadd.f32 %v702, %v754
    %v774 = vadd.f32 %v703, %v754
    %v775 = vadd.f32 %v704, %v754
    %v776 = vadd.f32 %v705, %v754
    %v777 = vadd.f32 %v706, %v754
    %v778 = vadd.f32 %v707, %v754
    %v779 = vadd.f32 %v708, %v754
    %v780 = vadd.f32 %v709, %v754
    %v781 = vadd.f32 %v710, %v754
    %v782 = vadd.f32 %v711, %v754
    %v783 = vadd.f32 %v712, %v754
    %v784 = vadd.f32 %v713, %v754
    %v785 = vadd.f32 %v714, %v754
    %v786 = vadd.f32 %v715, %v754
    %v787 = vadd.f32 %v716, %v754
    %v788 = vadd.f32 %v717, %v754
    %v789 = vadd.f32 %v718, %v754
    %v790 = vadd.f32 %v719, %v754
    %v791 = vadd.f32 %v720, %v754
    %v792 = vadd.f32 %v721, %v754
    %v793 = vadd.f32 %v722, %v754
    %v794 = vadd.f32 %v723, %v754
    %v795 = vadd.f32 %v724, %v754
    %v796 = vadd.f32 %v725, %v754
    %v797 = vadd.f32 %v726, %v754
    %v798 = vadd.f32 %v727, %v754
    %v799 = vadd.f32 %v728, %v754
    %v800 = vadd.f32 %v729, %v754
    %v801 = vadd.f32 %v730, %v754
    %v802 = vadd.f32 %v731, %v754
    %v803 = vadd.f32 %v732, %v754
    %v804 = vadd.f32 %v733, %v754
    %v805 = vadd.f32 %v734, %v754
    %v806 = vadd.f32 %v735, %v754
    %v807 = vadd.f32 %v736, %v754
    %v808 = vadd.f32 %v737, %v754
    %v809 = vadd.f32 %v738, %v754
    %v810 = vadd.f32 %v739, %v754
    %v811 = vadd.f32 %v740, %v754
    %v812 = vadd.f32 %v741, %v754
    %v813 = vadd.f32 %v742, %v754
    %v814 = vadd.f32 %v743, %v754
    %v815 = vadd.f32 %v744, %v754
    %v816 = vadd.f32 %v745, %v754
    %v817 = vadd.f32 %v746, %v754
    %v818 = vadd.f32 %v747, %v754
    %v819 = vadd.f32 %v748, %v754
    %v820 = vxor.u32 %v756, 2147483648
    %v821 = vxor.u32 %v757, 2147483648
    %v822 = vxor.u32 %v758, 2147483648
    %v823 = vxor.u32 %v759, 2147483648
    %v824 = vxor.u32 %v760, 2147483648
    %v825 = vxor.u32 %v761, 2147483648
    %v826 = vxor.u32 %v762, 2147483648
    %v827 = vxor.u32 %v763, 2147483648
    %v828 = vxor.u32 %v764, 2147483648
    %v829 = vxor.u32 %v765, 2147483648
    %v830 = vxor.u32 %v766, 2147483648
    %v831 = vxor.u32 %v767, 2147483648
    %v832 = vxor.u32 %v768, 2147483648
    %v833 = vxor.u32 %v769, 2147483648
    %v834 = vxor.u32 %v770, 2147483648
    %v835 = vxor.u32 %v771, 2147483648
    %v836 = vxor.u32 %v772, 2147483648
    %v837 = vxor.u32 %v773, 2147483648
    %v838 = vxor.u32 %v774, 2147483648
    %v839 = vxor.u32 %v775, 2147483648
    %v840 = vxor.u32 %v776, 2147483648
    %v841 = vxor.u32 %v777, 2147483648
    %v842 = vxor.u32 %v778, 2147483648
    %v843 = vxor.u32 %v779, 2147483648
    %v844 = vxor.u32 %v780, 2147483648
    %v845 = vxor.u32 %v781, 2147483648
    %v846 = vxor.u32 %v782, 2147483648
    %v847 = vxor.u32 %v783, 2147483648
    %v848 = vxor.u32 %v784, 2147483648
    %v849 = vxor.u32 %v785, 2147483648
    %v850 = vxor.u32 %v786, 2147483648
    %v851 = vxor.u32 %v787, 2147483648
    %v852 = vxor.u32 %v788, 2147483648
    %v853 = vxor.u32 %v789, 2147483648
    %v854 = vxor.u32 %v790, 2147483648
    %v855 = vxor.u32 %v791, 2147483648
    %v856 = vxor.u32 %v792, 2147483648
    %v857 = vxor.u32 %v793, 2147483648
    %v858 = vxor.u32 %v794, 2147483648
    %v859 = vxor.u32 %v795, 2147483648
    %v860 = vxor.u32 %v796, 2147483648
    %v861 = vxor.u32 %v797, 2147483648
    %v862 = vxor.u32 %v798, 2147483648
    %v863 = vxor.u32 %v799, 2147483648
    %v864 = vxor.u32 %v800, 2147483648
    %v865 = vxor.u32 %v801, 2147483648
    %v866 = vxor.u32 %v802, 2147483648
    %v867 = vxor.u32 %v803, 2147483648
    %v868 = vxor.u32 %v804, 2147483648
    %v869 = vxor.u32 %v805, 2147483648
    %v870 = vxor.u32 %v806, 2147483648
    %v871 = vxor.u32 %v807, 2147483648
    %v872 = vxor.u32 %v808, 2147483648
    %v873 = vxor.u32 %v809, 2147483648
    %v874 = vxor.u32 %v810, 2147483648
    %v875 = vxor.u32 %v811, 2147483648
    %v876 = vxor.u32 %v812, 2147483648
    %v877 = vxor.u32 %v813, 2147483648
    %v878 = vxor.u32 %v814, 2147483648
    %v879 = vxor.u32 %v815, 2147483648
    %v880 = vxor.u32 %v816, 2147483648
    %v881 = vxor.u32 %v817, 2147483648
    %v882 = vxor.u32 %v818, 2147483648
    %v883 = vxor.u32 %v819, 2147483648
    %v884 = vmul.f32 %v820, 1.442695
    %v885 = vpow.pop %v884
    %v886 = vmul.f32 %v821, 1.442695
    %v887 = vpow.pop %v886
    %v888 = vmul.f32 %v822, 1.442695
    %v889 = vpow.pop %v888
    %v890 = vmul.f32 %v823, 1.442695
    %v891 = vpow.pop %v890
    %v892 = vmul.f32 %v824, 1.442695
    %v893 = vpow.pop %v892
    %v894 = vmul.f32 %v825, 1.442695
    %v895 = vpow.pop %v894
    %v896 = vmul.f32 %v826, 1.442695
    %v897 = vpow.pop %v896
    %v898 = vmul.f32 %v827, 1.442695
    %v899 = vpow.pop %v898
    %v900 = vmul.f32 %v828, 1.442695
    %v901 = vpow.pop %v900
    %v902 = vmul.f32 %v829, 1.442695
    %v903 = vpow.pop %v902
    %v904 = vmul.f32 %v830, 1.442695
    %v905 = vpow.pop %v904
    %v906 = vmul.f32 %v831, 1.442695
    %v907 = vpow.pop %v906
    %v908 = vmul.f32 %v832, 1.442695
    %v909 = vpow.pop %v908
    %v910 = vmul.f32 %v833, 1.442695
    %v911 = vpow.pop %v910
    %v912 = vmul.f32 %v834, 1.442695
    %v913 = vpow.pop %v912
    %v914 = vmul.f32 %v835, 1.442695
    %v915 = vpow.pop %v914
    %v916 = vmul.f32 %v836, 1.442695
    %v917 = vpow.pop %v916
    %v918 = vmul.f32 %v837, 1.442695
    %v919 = vpow.pop %v918
    %v920 = vmul.f32 %v838, 1.442695
    %v921 = vpow.pop %v920
    %v922 = vmul.f32 %v839, 1.442695
    %v923 = vpow.pop %v922
    %v924 = vmul.f32 %v840, 1.442695
    %v925 = vpow.pop %v924
    %v926 = vmul.f32 %v841, 1.442695
    %v927 = vpow.pop %v926
    %v928 = vmul.f32 %v842, 1.442695
    %v929 = vpow.pop %v928
    %v930 = vmul.f32 %v843, 1.442695
    %v931 = vpow.pop %v930
    %v932 = vmul.f32 %v844, 1.442695
    %v933 = vpow.pop %v932
    %v934 = vmul.f32 %v845, 1.442695
    %v935 = vpow.pop %v934
    %v936 = vmul.f32 %v846, 1.442695
    %v937 = vpow.pop %v936
    %v938 = vmul.f32 %v847, 1.442695
    %v939 = vpow.pop %v938
    %v940 = vmul.f32 %v848, 1.442695
    %v941 = vpow.pop %v940
    %v942 = vmul.f32 %v849, 1.442695
    %v943 = vpow.pop %v942
    %v944 = vmul.f32 %v850, 1.442695
    %v945 = vpow.pop %v944
    %v946 = vmul.f32 %v851, 1.442695
    %v947 = vpow.pop %v946
    %v948 = vmul.f32 %v852, 1.442695
    %v949 = vpow.pop %v948
    %v950 = vmul.f32 %v853, 1.442695
    %v951 = vpow.pop %v950
    %v952 = vmul.f32 %v854, 1.442695
    %v953 = vpow.pop %v952
    %v954 = vmul.f32 %v855, 1.442695
    %v955 = vpow.pop %v954
    %v956 = vmul.f32 %v856, 1.442695
    %v957 = vpow.pop %v956
    %v958 = vmul.f32 %v857, 1.442695
    %v959 = vpow.pop %v958
    %v960 = vmul.f32 %v858, 1.442695
    %v961 = vpow.pop %v960
    %v962 = vmul.f32 %v859, 1.442695
    %v963 = vpow.pop %v962
    %v964 = vmul.f32 %v860, 1.442695
    %v965 = vpow.pop %v964
    %v966 = vmul.f32 %v861, 1.442695
    %v967 = vpow.pop %v966
    %v968 = vmul.f32 %v862, 1.442695
    %v969 = vpow.pop %v968
    %v970 = vmul.f32 %v863, 1.442695
    %v971 = vpow.pop %v970
    %v972 = vmul.f32 %v864, 1.442695
    %v973 = vpow.pop %v972
    %v974 = vmul.f32 %v865, 1.442695
    %v975 = vpow.pop %v974
    %v976 = vmul.f32 %v866, 1.442695
    %v977 = vpow.pop %v976
    %v978 = vmul.f32 %v867, 1.442695
    %v979 = vpow.pop %v978
    %v980 = vmul.f32 %v868, 1.442695
    %v981 = vpow.pop %v980
    %v982 = vmul.f32 %v869, 1.442695
    %v983 = vpow.pop %v982
    %v984 = vmul.f32 %v870, 1.442695
    %v985 = vpow.pop %v984
    %v986 = vmul.f32 %v871, 1.442695
    %v987 = vpow.pop %v986
    %v988 = vmul.f32 %v872, 1.442695
    %v989 = vpow.pop %v988
    %v990 = vmul.f32 %v873, 1.442695
    %v991 = vpow.pop %v990
    %v992 = vmul.f32 %v874, 1.442695
    %v993 = vpow.pop %v992
    %v994 = vmul.f32 %v875, 1.442695
    %v995 = vpow.pop %v994
    %v996 = vmul.f32 %v876, 1.442695
    %v997 = vpow.pop %v996
    %v998 = vmul.f32 %v877, 1.442695
    %v999 = vpow.pop %v998
    %v1000 = vmul.f32 %v878, 1.442695
    %v1001 = vpow.pop %v1000
    %v1002 = vmul.f32 %v879, 1.442695
    %v1003 = vpow.pop %v1002
    %v1004 = vmul.f32 %v880, 1.442695
    %v1005 = vpow.pop %v1004
    %v1006 = vmul.f32 %v881, 1.442695
    %v1007 = vpow.pop %v1006
    %v1008 = vmul.f32 %v882, 1.442695
    %v1009 = vpow.pop %v1008
    %v1010 = vmul.f32 %v883, 1.442695
    %v1011 = vpow.pop %v1010
    %v1012 = vadd.f32 %v885, 1.0
    %v1013 = vadd.f32 %v887, 1.0
    %v1014 = vadd.f32 %v889, 1.0
    %v1015 = vadd.f32 %v891, 1.0
    %v1016 = vadd.f32 %v893, 1.0
    %v1017 = vadd.f32 %v895, 1.0
    %v1018 = vadd.f32 %v897, 1.0
    %v1019 = vadd.f32 %v899, 1.0
    %v1020 = vadd.f32 %v901, 1.0
    %v1021 = vadd.f32 %v903, 1.0
    %v1022 = vadd.f32 %v905, 1.0
    %v1023 = vadd.f32 %v907, 1.0
    %v1024 = vadd.f32 %v909, 1.0
    %v1025 = vadd.f32 %v911, 1.0
    %v1026 = vadd.f32 %v913, 1.0
    %v1027 = vadd.f32 %v915, 1.0
    %v1028 = vadd.f32 %v917, 1.0
    %v1029 = vadd.f32 %v919, 1.0
    %v1030 = vadd.f32 %v921, 1.0
    %v1031 = vadd.f32 %v923, 1.0
    %v1032 = vadd.f32 %v925, 1.0
    %v1033 = vadd.f32 %v927, 1.0
    %v1034 = vadd.f32 %v929, 1.0
    %v1035 = vadd.f32 %v931, 1.0
    %v1036 = vadd.f32 %v933, 1.0
    %v1037 = vadd.f32 %v935, 1.0
    %v1038 = vadd.f32 %v937, 1.0
    %v1039 = vadd.f32 %v939, 1.0
    %v1040 = vadd.f32 %v941, 1.0
    %v1041 = vadd.f32 %v943, 1.0
    %v1042 = vadd.f32 %v945, 1.0
    %v1043 = vadd.f32 %v947, 1.0
    %v1044 = vadd.f32 %v949, 1.0
    %v1045 = vadd.f32 %v951, 1.0
    %v1046 = vadd.f32 %v953, 1.0
    %v1047 = vadd.f32 %v955, 1.0
    %v1048 = vadd.f32 %v957, 1.0
    %v1049 = vadd.f32 %v959, 1.0
    %v1050 = vadd.f32 %v961, 1.0
    %v1051 = vadd.f32 %v963, 1.0
    %v1052 = vadd.f32 %v965, 1.0
    %v1053 = vadd.f32 %v967, 1.0
    %v1054 = vadd.f32 %v969, 1.0
    %v1055 = vadd.f32 %v971, 1.0
    %v1056 = vadd.f32 %v973, 1.0
    %v1057 = vadd.f32 %v975, 1.0
    %v1058 = vadd.f32 %v977, 1.0
    %v1059 = vadd.f32 %v979, 1.0
    %v1060 = vadd.f32 %v981, 1.0
    %v1061 = vadd.f32 %v983, 1.0
    %v1062 = vadd.f32 %v985, 1.0
    %v1063 = vadd.f32 %v987, 1.0
    %v1064 = vadd.f32 %v989, 1.0
    %v1065 = vadd.f32 %v991, 1.0
    %v1066 = vadd.f32 %v993, 1.0
    %v1067 = vadd.f32 %v995, 1.0
    %v1068 = vadd.f32 %v997, 1.0
    %v1069 = vadd.f32 %v999, 1.0
    %v1070 = vadd.f32 %v1001, 1.0
    %v1071 = vadd.f32 %v1003, 1.0
    %v1072 = vadd.f32 %v1005, 1.0
    %v1073 = vadd.f32 %v1007, 1.0
    %v1074 = vadd.f32 %v1009, 1.0
    %v1075 = vadd.f32 %v1011, 1.0
    %v1076 = vrcp.pop %v1012
    %v1077 = vmul.f32 1.0, %v1076
    %v1078 = vrcp.pop %v1013
    %v1079 = vmul.f32 1.0, %v1078
    %v1080 = vrcp.pop %v1014
    %v1081 = vmul.f32 1.0, %v1080
    %v1082 = vrcp.pop %v1015
    %v1083 = vmul.f32 1.0, %v1082
    %v1084 = vrcp.pop %v1016
    %v1085 = vmul.f32 1.0, %v1084
    %v1086 = vrcp.pop %v1017
    %v1087 = vmul.f32 1.0, %v1086
    %v1088 = vrcp.pop %v1018
    %v1089 = vmul.f32 1.0, %v1088
    %v1090 = vrcp.pop %v1019
    %v1091 = vmul.f32 1.0, %v1090
    %v1092 = vrcp.pop %v1020
    %v1093 = vmul.f32 1.0, %v1092
    %v1094 = vrcp.pop %v1021
    %v1095 = vmul.f32 1.0, %v1094
    %v1096 = vrcp.pop %v1022
    %v1097 = vmul.f32 1.0, %v1096
    %v1098 = vrcp.pop %v1023
    %v1099 = vmul.f32 1.0, %v1098
    %v1100 = vrcp.pop %v1024
    %v1101 = vmul.f32 1.0, %v1100
    %v1102 = vrcp.pop %v1025
    %v1103 = vmul.f32 1.0, %v1102
    %v1104 = vrcp.pop %v1026
    %v1105 = vmul.f32 1.0, %v1104
    %v1106 = vrcp.pop %v1027
    %v1107 = vmul.f32 1.0, %v1106
    %v1108 = vrcp.pop %v1028
    %v1109 = vmul.f32 1.0, %v1108
    %v1110 = vrcp.pop %v1029
    %v1111 = vmul.f32 1.0, %v1110
    %v1112 = vrcp.pop %v1030
    %v1113 = vmul.f32 1.0, %v1112
    %v1114 = vrcp.pop %v1031
    %v1115 = vmul.f32 1.0, %v1114
    %v1116 = vrcp.pop %v1032
    %v1117 = vmul.f32 1.0, %v1116
    %v1118 = vrcp.pop %v1033
    %v1119 = vmul.f32 1.0, %v1118
    %v1120 = vrcp.pop %v1034
    %v1121 = vmul.f32 1.0, %v1120
    %v1122 = vrcp.pop %v1035
    %v1123 = vmul.f32 1.0, %v1122
    %v1124 = vrcp.pop %v1036
    %v1125 = vmul.f32 1.0, %v1124
    %v1126 = vrcp.pop %v1037
    %v1127 = vmul.f32 1.0, %v1126
    %v1128 = vrcp.pop %v1038
    %v1129 = vmul.f32 1.0, %v1128
    %v1130 = vrcp.pop %v1039
    %v1131 = vmul.f32 1.0, %v1130
    %v1132 = vrcp.pop %v1040
    %v1133 = vmul.f32 1.0, %v1132
    %v1134 = vrcp.pop %v1041
    %v1135 = vmul.f32 1.0, %v1134
    %v1136 = vrcp.pop %v1042
    %v1137 = vmul.f32 1.0, %v1136
    %v1138 = vrcp.pop %v1043
    %v1139 = vmul.f32 1.0, %v1138
    %v1140 = vrcp.pop %v1044
    %v1141 = vmul.f32 1.0, %v1140
    %v1142 = vrcp.pop %v1045
    %v1143 = vmul.f32 1.0, %v1142
    %v1144 = vrcp.pop %v1046
    %v1145 = vmul.f32 1.0, %v1144
    %v1146 = vrcp.pop %v1047
    %v1147 = vmul.f32 1.0, %v1146
    %v1148 = vrcp.pop %v1048
    %v1149 = vmul.f32 1.0, %v1148
    %v1150 = vrcp.pop %v1049
    %v1151 = vmul.f32 1.0, %v1150
    %v1152 = vrcp.pop %v1050
    %v1153 = vmul.f32 1.0, %v1152
    %v1154 = vrcp.pop %v1051
    %v1155 = vmul.f32 1.0, %v1154
    %v1156 = vrcp.pop %v1052
    %v1157 = vmul.f32 1.0, %v1156
    %v1158 = vrcp.pop %v1053
    %v1159 = vmul.f32 1.0, %v1158
    %v1160 = vrcp.pop %v1054
    %v1161 = vmul.f32 1.0, %v1160
    %v1162 = vrcp.pop %v1055
    %v1163 = vmul.f32 1.0, %v1162
    %v1164 = vrcp.pop %v1056
    %v1165 = vmul.f32 1.0, %v1164
    %v1166 = vrcp.pop %v1057
    %v1167 = vmul.f32 1.0, %v1166
    %v1168 = vrcp.pop %v1058
    %v1169 = vmul.f32 1.0, %v1168
    %v1170 = vrcp.pop %v1059
    %v1171 = vmul.f32 1.0, %v1170
    %v1172 = vrcp.pop %v1060
    %v1173 = vmul.f32 1.0, %v1172
    %v1174 = vrcp.pop %v1061
    %v1175 = vmul.f32 1.0, %v1174
    %v1176 = vrcp.pop %v1062
    %v1177 = vmul.f32 1.0, %v1176
    %v1178 = vrcp.pop %v1063
    %v1179 = vmul.f32 1.0, %v1178
    %v1180 = vrcp.pop %v1064
    %v1181 = vmul.f32 1.0, %v1180
    %v1182 = vrcp.pop %v1065
    %v1183 = vmul.f32 1.0, %v1182
    %v1184 = vrcp.pop %v1066
    %v1185 = vmul.f32 1.0, %v1184
    %v1186 = vrcp.pop %v1067
    %v1187 = vmul.f32 1.0, %v1186
    %v1188 = vrcp.pop %v1068
    %v1189 = vmul.f32 1.0, %v1188
    %v1190 = vrcp.pop %v1069
    %v1191 = vmul.f32 1.0, %v1190
    %v1192 = vrcp.pop %v1070
    %v1193 = vmul.f32 1.0, %v1192
    %v1194 = vrcp.pop %v1071
    %v1195 = vmul.f32 1.0, %v1194
    %v1196 = vrcp.pop %v1072
    %v1197 = vmul.f32 1.0, %v1196
    %v1198 = vrcp.pop %v1073
    %v1199 = vmul.f32 1.0, %v1198
    %v1200 = vrcp.pop %v1074
    %v1201 = vmul.f32 1.0, %v1200
    %v1202 = vrcp.pop %v1075
    %v1203 = vmul.f32 1.0, %v1202
    %v1204 = vmul.f32 %v756, %v1077
    %v1205 = vmul.f32 %v757, %v1079
    %v1206 = vmul.f32 %v758, %v1081
    %v1207 = vmul.f32 %v759, %v1083
    %v1208 = vmul.f32 %v760, %v1085
    %v1209 = vmul.f32 %v761, %v1087
    %v1210 = vmul.f32 %v762, %v1089
    %v1211 = vmul.f32 %v763, %v1091
    %v1212 = vmul.f32 %v764, %v1093
    %v1213 = vmul.f32 %v765, %v1095
    %v1214 = vmul.f32 %v766, %v1097
    %v1215 = vmul.f32 %v767, %v1099
    %v1216 = vmul.f32 %v768, %v1101
    %v1217 = vmul.f32 %v769, %v1103
    %v1218 = vmul.f32 %v770, %v1105
    %v1219 = vmul.f32 %v771, %v1107
    %v1220 = vmul.f32 %v772, %v1109
    %v1221 = vmul.f32 %v773, %v1111
    %v1222 = vmul.f32 %v774, %v1113
    %v1223 = vmul.f32 %v775, %v1115
    %v1224 = vmul.f32 %v776, %v1117
    %v1225 = vmul.f32 %v777, %v1119
    %v1226 = vmul.f32 %v778, %v1121
    %v1227 = vmul.f32 %v779, %v1123
    %v1228 = vmul.f32 %v780, %v1125
    %v1229 = vmul.f32 %v781, %v1127
    %v1230 = vmul.f32 %v782, %v1129
    %v1231 = vmul.f32 %v783, %v1131
    %v1232 = vmul.f32 %v784, %v1133
    %v1233 = vmul.f32 %v785, %v1135
    %v1234 = vmul.f32 %v786, %v1137
    %v1235 = vmul.f32 %v787, %v1139
    %v1236 = vmul.f32 %v788, %v1141
    %v1237 = vmul.f32 %v789, %v1143
    %v1238 = vmul.f32 %v790, %v1145
    %v1239 = vmul.f32 %v791, %v1147
    %v1240 = vmul.f32 %v792, %v1149
    %v1241 = vmul.f32 %v793, %v1151
    %v1242 = vmul.f32 %v794, %v1153
    %v1243 = vmul.f32 %v795, %v1155
    %v1244 = vmul.f32 %v796, %v1157
    %v1245 = vmul.f32 %v797, %v1159
    %v1246 = vmul.f32 %v798, %v1161
    %v1247 = vmul.f32 %v799, %v1163
    %v1248 = vmul.f32 %v800, %v1165
    %v1249 = vmul.f32 %v801, %v1167
    %v1250 = vmul.f32 %v802, %v1169
    %v1251 = vmul.f32 %v803, %v1171
    %v1252 = vmul.f32 %v804, %v1173
    %v1253 = vmul.f32 %v805, %v1175
    %v1254 = vmul.f32 %v806, %v1177
    %v1255 = vmul.f32 %v807, %v1179
    %v1256 = vmul.f32 %v808, %v1181
    %v1257 = vmul.f32 %v809, %v1183
    %v1258 = vmul.f32 %v810, %v1185
    %v1259 = vmul.f32 %v811, %v1187
    %v1260 = vmul.f32 %v812, %v1189
    %v1261 = vmul.f32 %v813, %v1191
    %v1262 = vmul.f32 %v814, %v1193
    %v1263 = vmul.f32 %v815, %v1195
    %v1264 = vmul.f32 %v816, %v1197
    %v1265 = vmul.f32 %v817, %v1199
    %v1266 = vmul.f32 %v818, %v1201
    %v1267 = vmul.f32 %v819, %v1203
    %v1268 = vpack.c.bf16 %v1205, %v1204
    %v1269 = vpack.c.bf16 %v1207, %v1206
    %v1270 = vpack.c.bf16 %v1209, %v1208
    %v1271 = vpack.c.bf16 %v1211, %v1210
    %v1272 = vpack.c.bf16 %v1213, %v1212
    %v1273 = vpack.c.bf16 %v1215, %v1214
    %v1274 = vpack.c.bf16 %v1217, %v1216
    %v1275 = vpack.c.bf16 %v1219, %v1218
    %v1276 = vpack.c.bf16 %v1221, %v1220
    %v1277 = vpack.c.bf16 %v1223, %v1222
    %v1278 = vpack.c.bf16 %v1225, %v1224
    %v1279 = vpack.c.bf16 %v1227, %v1226
    %v1280 = vpack.c.bf16 %v1229, %v1228
    %v1281 = vpack.c.bf16 %v1231, %v1230
    %v1282 = vpack.c.bf16 %v1233, %v1232
    %v1283 = vpack.c.bf16 %v1235, %v1234
    %v1284 = vpack.c.bf16 %v1237, %v1236
    %v1285 = vpack.c.bf16 %v1239, %v1238
    %v1286 = vpack.c.bf16 %v1241, %v1240
    %v1287 = vpack.c.bf16 %v1243, %v1242
    %v1288 = vpack.c.bf16 %v1245, %v1244
    %v1289 = vpack.c.bf16 %v1247, %v1246
    %v1290 = vpack.c.bf16 %v1249, %v1248
    %v1291 = vpack.c.bf16 %v1251, %v1250
    %v1292 = vpack.c.bf16 %v1253, %v1252
    %v1293 = vpack.c.bf16 %v1255, %v1254
    %v1294 = vpack.c.bf16 %v1257, %v1256
    %v1295 = vpack.c.bf16 %v1259, %v1258
    %v1296 = vpack.c.bf16 %v1261, %v1260
    %v1297 = vpack.c.bf16 %v1263, %v1262
    %v1298 = vpack.c.bf16 %v1265, %v1264
    %v1299 = vpack.c.bf16 %v1267, %v1266
    %v1332 = vunpack.c.l.b16 %v1268
    %v1333 = vunpack.c.h.b16 %v1268
    %v1334 = vunpack.c.l.b16 %v1269
    %v1335 = vunpack.c.h.b16 %v1269
    %v1336 = vunpack.c.l.b16 %v1270
    %v1337 = vunpack.c.h.b16 %v1270
    %v1338 = vunpack.c.l.b16 %v1271
    %v1339 = vunpack.c.h.b16 %v1271
    %v1340 = vunpack.c.l.b16 %v1272
    %v1341 = vunpack.c.h.b16 %v1272
    %v1342 = vunpack.c.l.b16 %v1273
    %v1343 = vunpack.c.h.b16 %v1273
    %v1344 = vunpack.c.l.b16 %v1274
    %v1345 = vunpack.c.h.b16 %v1274
    %v1346 = vunpack.c.l.b16 %v1275
    %v1347 = vunpack.c.h.b16 %v1275
    %v1348 = vunpack.c.l.b16 %v1276
    %v1349 = vunpack.c.h.b16 %v1276
    %v1350 = vunpack.c.l.b16 %v1277
    %v1351 = vunpack.c.h.b16 %v1277
    %v1352 = vunpack.c.l.b16 %v1278
    %v1353 = vunpack.c.h.b16 %v1278
    %v1354 = vunpack.c.l.b16 %v1279
    %v1355 = vunpack.c.h.b16 %v1279
    %v1356 = vunpack.c.l.b16 %v1280
    %v1357 = vunpack.c.h.b16 %v1280
    %v1358 = vunpack.c.l.b16 %v1281
    %v1359 = vunpack.c.h.b16 %v1281
    %v1360 = vunpack.c.l.b16 %v1282
    %v1361 = vunpack.c.h.b16 %v1282
    %v1362 = vunpack.c.l.b16 %v1283
    %v1363 = vunpack.c.h.b16 %v1283
    %v1364 = vunpack.c.l.b16 %v1284
    %v1365 = vunpack.c.h.b16 %v1284
    %v1366 = vunpack.c.l.b16 %v1285
    %v1367 = vunpack.c.h.b16 %v1285
    %v1368 = vunpack.c.l.b16 %v1286
    %v1369 = vunpack.c.h.b16 %v1286
    %v1370 = vunpack.c.l.b16 %v1287
    %v1371 = vunpack.c.h.b16 %v1287
    %v1372 = vunpack.c.l.b16 %v1288
    %v1373 = vunpack.c.h.b16 %v1288
    %v1374 = vunpack.c.l.b16 %v1289
    %v1375 = vunpack.c.h.b16 %v1289
    %v1376 = vunpack.c.l.b16 %v1290
    %v1377 = vunpack.c.h.b16 %v1290
    %v1378 = vunpack.c.l.b16 %v1291
    %v1379 = vunpack.c.h.b16 %v1291
    %v1380 = vunpack.c.l.b16 %v1292
    %v1381 = vunpack.c.h.b16 %v1292
    %v1382 = vunpack.c.l.b16 %v1293
    %v1383 = vunpack.c.h.b16 %v1293
    %v1384 = vunpack.c.l.b16 %v1294
    %v1385 = vunpack.c.h.b16 %v1294
    %v1386 = vunpack.c.l.b16 %v1295
    %v1387 = vunpack.c.h.b16 %v1295
    %v1388 = vunpack.c.l.b16 %v1296
    %v1389 = vunpack.c.h.b16 %v1296
    %v1390 = vunpack.c.l.b16 %v1297
    %v1391 = vunpack.c.h.b16 %v1297
    %v1392 = vunpack.c.l.b16 %v1298
    %v1393 = vunpack.c.h.b16 %v1298
    %v1394 = vunpack.c.l.b16 %v1299
    %v1395 = vunpack.c.h.b16 %v1299
    %v1396 = vpack.c.b16 %v1332, %v1332
    %v1397 = vpack.c.b16 %v1333, %v1333
    %v1398 = vpack.c.b16 %v1334, %v1334
    %v1399 = vpack.c.b16 %v1335, %v1335
    %v1400 = vpack.c.b16 %v1336, %v1336
    %v1401 = vpack.c.b16 %v1337, %v1337
    %v1402 = vpack.c.b16 %v1338, %v1338
    %v1403 = vpack.c.b16 %v1339, %v1339
    %v1404 = vpack.c.b16 %v1340, %v1340
    %v1405 = vpack.c.b16 %v1341, %v1341
    %v1406 = vpack.c.b16 %v1342, %v1342
    %v1407 = vpack.c.b16 %v1343, %v1343
    %v1408 = vpack.c.b16 %v1344, %v1344
    %v1409 = vpack.c.b16 %v1345, %v1345
    %v1410 = vpack.c.b16 %v1346, %v1346
    %v1411 = vpack.c.b16 %v1347, %v1347
    %v1412 = vpack.c.b16 %v1348, %v1348
    %v1413 = vpack.c.b16 %v1349, %v1349
    %v1414 = vpack.c.b16 %v1350, %v1350
    %v1415 = vpack.c.b16 %v1351, %v1351
    %v1416 = vpack.c.b16 %v1352, %v1352
    %v1417 = vpack.c.b16 %v1353, %v1353
    %v1418 = vpack.c.b16 %v1354, %v1354
    %v1419 = vpack.c.b16 %v1355, %v1355
    %v1420 = vpack.c.b16 %v1356, %v1356
    %v1421 = vpack.c.b16 %v1357, %v1357
    %v1422 = vpack.c.b16 %v1358, %v1358
    %v1423 = vpack.c.b16 %v1359, %v1359
    %v1424 = vpack.c.b16 %v1360, %v1360
    %v1425 = vpack.c.b16 %v1361, %v1361
    %v1426 = vpack.c.b16 %v1362, %v1362
    %v1427 = vpack.c.b16 %v1363, %v1363
    %v1428 = vpack.c.b16 %v1364, %v1364
    %v1429 = vpack.c.b16 %v1365, %v1365
    %v1430 = vpack.c.b16 %v1366, %v1366
    %v1431 = vpack.c.b16 %v1367, %v1367
    %v1432 = vpack.c.b16 %v1368, %v1368
    %v1433 = vpack.c.b16 %v1369, %v1369
    %v1434 = vpack.c.b16 %v1370, %v1370
    %v1435 = vpack.c.b16 %v1371, %v1371
    %v1436 = vpack.c.b16 %v1372, %v1372
    %v1437 = vpack.c.b16 %v1373, %v1373
    %v1438 = vpack.c.b16 %v1374, %v1374
    %v1439 = vpack.c.b16 %v1375, %v1375
    %v1440 = vpack.c.b16 %v1376, %v1376
    %v1441 = vpack.c.b16 %v1377, %v1377
    %v1442 = vpack.c.b16 %v1378, %v1378
    %v1443 = vpack.c.b16 %v1379, %v1379
    %v1444 = vpack.c.b16 %v1380, %v1380
    %v1445 = vpack.c.b16 %v1381, %v1381
    %v1446 = vpack.c.b16 %v1382, %v1382
    %v1447 = vpack.c.b16 %v1383, %v1383
    %v1448 = vpack.c.b16 %v1384, %v1384
    %v1449 = vpack.c.b16 %v1385, %v1385
    %v1450 = vpack.c.b16 %v1386, %v1386
    %v1451 = vpack.c.b16 %v1387, %v1387
    %v1452 = vpack.c.b16 %v1388, %v1388
    %v1453 = vpack.c.b16 %v1389, %v1389
    %v1454 = vpack.c.b16 %v1390, %v1390
    %v1455 = vpack.c.b16 %v1391, %v1391
    %v1456 = vpack.c.b16 %v1392, %v1392
    %v1457 = vpack.c.b16 %v1393, %v1393
    %v1458 = vpack.c.b16 %v1394, %v1394
    %v1459 = vpack.c.b16 %v1395, %v1395
    %1524 = vst [vmem:[#allocation8] sm:$0xf] %v1396
    %1525 = vst [vmem:[#allocation8 + $0x4] sm:$0xf] %v1397
    %1526 = vst [vmem:[#allocation8 + $0x8] sm:$0xf] %v1398
    %1527 = vst [vmem:[#allocation8 + $0xc] sm:$0xf] %v1399
    %1528 = vst [vmem:[#allocation8 + $0x10] sm:$0xf] %v1400
    %1529 = vst [vmem:[#allocation8 + $0x14] sm:$0xf] %v1401
    %1530 = vst [vmem:[#allocation8 + $0x18] sm:$0xf] %v1402
    %1531 = vst [vmem:[#allocation8 + $0x1c] sm:$0xf] %v1403
    %1532 = vst [vmem:[#allocation8 + $0x20] sm:$0xf] %v1404
    %1533 = vst [vmem:[#allocation8 + $0x24] sm:$0xf] %v1405
    %1534 = vst [vmem:[#allocation8 + $0x28] sm:$0xf] %v1406
    %1535 = vst [vmem:[#allocation8 + $0x2c] sm:$0xf] %v1407
    %1536 = vst [vmem:[#allocation8 + $0x30] sm:$0xf] %v1408
    %1537 = vst [vmem:[#allocation8 + $0x34] sm:$0xf] %v1409
    %1538 = vst [vmem:[#allocation8 + $0x38] sm:$0xf] %v1410
    %1539 = vst [vmem:[#allocation8 + $0x3c] sm:$0xf] %v1411
    %1540 = vst [vmem:[#allocation8 + $0x40] sm:$0xf] %v1412
    %1541 = vst [vmem:[#allocation8 + $0x44] sm:$0xf] %v1413
    %1542 = vst [vmem:[#allocation8 + $0x48] sm:$0xf] %v1414
    %1543 = vst [vmem:[#allocation8 + $0x4c] sm:$0xf] %v1415
    %1544 = vst [vmem:[#allocation8 + $0x50] sm:$0xf] %v1416
    %1545 = vst [vmem:[#allocation8 + $0x54] sm:$0xf] %v1417
    %1546 = vst [vmem:[#allocation8 + $0x58] sm:$0xf] %v1418
    %1547 = vst [vmem:[#allocation8 + $0x5c] sm:$0xf] %v1419
    %1548 = vst [vmem:[#allocation8 + $0x60] sm:$0xf] %v1420
    %1549 = vst [vmem:[#allocation8 + $0x64] sm:$0xf] %v1421
    %1550 = vst [vmem:[#allocation8 + $0x68] sm:$0xf] %v1422
    %1551 = vst [vmem:[#allocation8 + $0x6c] sm:$0xf] %v1423
    %1552 = vst [vmem:[#allocation8 + $0x70] sm:$0xf] %v1424
    %1553 = vst [vmem:[#allocation8 + $0x74] sm:$0xf] %v1425
    %1554 = vst [vmem:[#allocation8 + $0x78] sm:$0xf] %v1426
    %1555 = vst [vmem:[#allocation8 + $0x7c] sm:$0xf] %v1427
    %1556 = vst [vmem:[#allocation8 + $0x80] sm:$0xf] %v1428
    %1557 = vst [vmem:[#allocation8 + $0x84] sm:$0xf] %v1429
    %1558 = vst [vmem:[#allocation8 + $0x88] sm:$0xf] %v1430
    %1559 = vst [vmem:[#allocation8 + $0x8c] sm:$0xf] %v1431
    %1560 = vst [vmem:[#allocation8 + $0x90] sm:$0xf] %v1432
    %1561 = vst [vmem:[#allocation8 + $0x94] sm:$0xf] %v1433
    %1562 = vst [vmem:[#allocation8 + $0x98] sm:$0xf] %v1434
    %1563 = vst [vmem:[#allocation8 + $0x9c] sm:$0xf] %v1435
    %1564 = vst [vmem:[#allocation8 + $0xa0] sm:$0xf] %v1436
    %1565 = vst [vmem:[#allocation8 + $0xa4] sm:$0xf] %v1437
    %1566 = vst [vmem:[#allocation8 + $0xa8] sm:$0xf] %v1438
    %1567 = vst [vmem:[#allocation8 + $0xac] sm:$0xf] %v1439
    %1568 = vst [vmem:[#allocation8 + $0xb0] sm:$0xf] %v1440
    %1569 = vst [vmem:[#allocation8 + $0xb4] sm:$0xf] %v1441
    %1570 = vst [vmem:[#allocation8 + $0xb8] sm:$0xf] %v1442
    %1571 = vst [vmem:[#allocation8 + $0xbc] sm:$0xf] %v1443
    %1572 = vst [vmem:[#allocation8 + $0xc0] sm:$0xf] %v1444
    %1573 = vst [vmem:[#allocation8 + $0xc4] sm:$0xf] %v1445
    %1574 = vst [vmem:[#allocation8 + $0xc8] sm:$0xf] %v1446
    %1575 = vst [vmem:[#allocation8 + $0xcc] sm:$0xf] %v1447
    %1576 = vst [vmem:[#allocation8 + $0xd0] sm:$0xf] %v1448
    %1577 = vst [vmem:[#allocation8 + $0xd4] sm:$0xf] %v1449
    %1578 = vst [vmem:[#allocation8 + $0xd8] sm:$0xf] %v1450
    %1579 = vst [vmem:[#allocation8 + $0xdc] sm:$0xf] %v1451
    %1580 = vst [vmem:[#allocation8 + $0xe0] sm:$0xf] %v1452
    %1581 = vst [vmem:[#allocation8 + $0xe4] sm:$0xf] %v1453
    %1582 = vst [vmem:[#allocation8 + $0xe8] sm:$0xf] %v1454
    %1583 = vst [vmem:[#allocation8 + $0xec] sm:$0xf] %v1455
    %1584 = vst [vmem:[#allocation8 + $0xf0] sm:$0xf] %v1456
    %1585 = vst [vmem:[#allocation8 + $0xf4] sm:$0xf] %v1457
    %1586 = vst [vmem:[#allocation8 + $0xf8] sm:$0xf] %v1458
    %1587 = vst [vmem:[#allocation8 + $0xfc] sm:$0xf] %v1459
    %v1588 = vld [vmem:[#allocation7] sm:$0xf]
    %v1589 = vld [vmem:[#allocation7 + $0x4] sm:$0xf]
    %v1590 = vld [vmem:[#allocation7 + $0x8] sm:$0xf]
    %v1591 = vld [vmem:[#allocation7 + $0xc] sm:$0xf]
    %v1592 = vld [vmem:[#allocation7 + $0x10] sm:$0xf]
    %v1593 = vld [vmem:[#allocation7 + $0x14] sm:$0xf]
    %v1594 = vld [vmem:[#allocation7 + $0x18] sm:$0xf]
    %v1595 = vld [vmem:[#allocation7 + $0x1c] sm:$0xf]
    %v1596 = vld [vmem:[#allocation7 + $0x20] sm:$0xf]
    %v1597 = vld [vmem:[#allocation7 + $0x24] sm:$0xf]
    %v1598 = vld [vmem:[#allocation7 + $0x28] sm:$0xf]
    %v1599 = vld [vmem:[#allocation7 + $0x2c] sm:$0xf]
    %v1600 = vld [vmem:[#allocation7 + $0x30] sm:$0xf]
    %v1601 = vld [vmem:[#allocation7 + $0x34] sm:$0xf]
    %v1602 = vld [vmem:[#allocation7 + $0x38] sm:$0xf]
    %v1603 = vld [vmem:[#allocation7 + $0x3c] sm:$0xf]
    %v1604 = vld [vmem:[%s5] sm:$0x1]
    %v1606 = vlaneseq
    %v1607 = vshrl.u32 %v1606, 7
    %v1608 = vsub.s32 0, %v1607
    %v1609 = vrot.slane %v1604, %v1608
    %v1627 = vunpack.c.l.b16 %v1588
    %v1628 = vunpack.c.l.b16 %v1589
    %v1629 = vunpack.c.l.b16 %v1590
    %v1630 = vunpack.c.l.b16 %v1591
    %v1631 = vunpack.c.l.b16 %v1592
    %v1632 = vunpack.c.l.b16 %v1593
    %v1633 = vunpack.c.l.b16 %v1594
    %v1634 = vunpack.c.l.b16 %v1595
    %v1635 = vunpack.c.l.b16 %v1596
    %v1636 = vunpack.c.l.b16 %v1597
    %v1637 = vunpack.c.l.b16 %v1598
    %v1638 = vunpack.c.l.b16 %v1599
    %v1639 = vunpack.c.l.b16 %v1600
    %v1640 = vunpack.c.l.b16 %v1601
    %v1641 = vunpack.c.l.b16 %v1602
    %v1642 = vunpack.c.l.b16 %v1603
    %v1643 = vpack.c.b16 %v1628, %v1627
    %v1644 = vpack.c.b16 %v1630, %v1629
    %v1645 = vpack.c.b16 %v1632, %v1631
    %v1646 = vpack.c.b16 %v1634, %v1633
    %v1647 = vpack.c.b16 %v1636, %v1635
    %v1648 = vpack.c.b16 %v1638, %v1637
    %v1649 = vpack.c.b16 %v1640, %v1639
    %v1650 = vpack.c.b16 %v1642, %v1641
    %1659 = vmatprep.subr.bf16.mxu0 0
    %1660 = vmatpush1.bf16.msra.mxu0 %v1643
    %1661 = vmatprep.subr.bf16.mxu0 0
    %1662 = vmatpush1.bf16.msra.mxu0 %v1644
    %1663 = vmatprep.subr.bf16.mxu0 0
    %1664 = vmatpush1.bf16.msra.mxu0 %v1645
    %1665 = vmatprep.subr.bf16.mxu0 0
    %1666 = vmatpush1.bf16.msra.mxu0 %v1646
    %1667 = vmatprep.subr.bf16.mxu0 0
    %1668 = vmatpush1.bf16.msra.mxu0 %v1647
    %1669 = vmatprep.subr.bf16.mxu0 0
    %1670 = vmatpush1.bf16.msra.mxu0 %v1648
    %1671 = vmatprep.subr.bf16.mxu0 0
    %1672 = vmatpush1.bf16.msra.mxu0 %v1649
    %1673 = vmatprep.subr.bf16.mxu0 0
    %1674 = vmatpush1.bf16.msra.mxu0 %v1650
    %1675 = vmatprep.subr.bf16.mxu0 0
    %1676 = vmatpush1.bf16.msra.mxu0 0
    %1677 = vmatprep.subr.bf16.mxu0 0
    %1678 = vmatpush1.bf16.msra.mxu0 0
    %1679 = vmatprep.subr.bf16.mxu0 0
    %1680 = vmatpush1.bf16.msra.mxu0 0
    %1681 = vmatprep.subr.bf16.mxu0 0
    %1682 = vmatpush1.bf16.msra.mxu0 0
    %1683 = vmatprep.subr.bf16.mxu0 0
    %1684 = vmatpush1.bf16.msra.mxu0 0
    %1685 = vmatprep.subr.bf16.mxu0 0
    %1686 = vmatpush1.bf16.msra.mxu0 0
    %1687 = vmatprep.subr.bf16.mxu0 0
    %1688 = vmatpush1.bf16.msra.mxu0 0
    %1689 = vmatprep.subr.bf16.mxu0 0
    %1690 = vmatpush1.bf16.msra.mxu0 0
    %1691 = vmatprep.mubr.bf16.mxu0 0
    %1692 = vmatmul.mubr.bf16.gmra.mrb[0].mxu0 %v277
    %v1693 = vpop.f32.mrb[0].mxu0
    %v1694 = vadd.f32 %v1609, %v1693
    %v1695 = vpop.f32.mrb[0].mxu0
    %v1696 = vpop.f32.mrb[0].mxu0
    %v1697 = vadd.f32 %v1609, %v1696
    %v1698 = vpop.f32.mrb[0].mxu0
    %1699 = vmatprep.mubr.bf16.mxu0 0
    %1700 = vmatmul.mubr.bf16.gmra.mrb[0].mxu0 %v278
    %v1701 = vpop.f32.mrb[0].mxu0
    %v1702 = vadd.f32 %v1609, %v1701
    %v1703 = vpop.f32.mrb[0].mxu0
    %v1704 = vpop.f32.mrb[0].mxu0
    %v1705 = vadd.f32 %v1609, %v1704
    %v1706 = vpop.f32.mrb[0].mxu0
    %1707 = vmatprep.mubr.bf16.mxu0 0
    %1708 = vmatmul.mubr.bf16.gmra.mrb[0].mxu0 %v279
    %v1709 = vpop.f32.mrb[0].mxu0
    %v1710 = vadd.f32 %v1609, %v1709
    %v1711 = vpop.f32.mrb[0].mxu0
    %v1712 = vpop.f32.mrb[0].mxu0
    %v1713 = vadd.f32 %v1609, %v1712
    %v1714 = vpop.f32.mrb[0].mxu0
    %1715 = vmatprep.mubr.bf16.mxu0 0
    %1716 = vmatmul.mubr.bf16.gmra.mrb[0].mxu0 %v280
    %v1717 = vpop.f32.mrb[0].mxu0
    %v1718 = vadd.f32 %v1609, %v1717
    %v1719 = vpop.f32.mrb[0].mxu0
    %v1720 = vpop.f32.mrb[0].mxu0
    %v1721 = vadd.f32 %v1609, %v1720
    %v1722 = vpop.f32.mrb[0].mxu0
    %1723 = vmatprep.mubr.bf16.mxu0 0
    %1724 = vmatmul.mubr.bf16.gmra.mrb[0].mxu0 %v281
    %v1725 = vpop.f32.mrb[0].mxu0
    %v1726 = vadd.f32 %v1609, %v1725
    %v1727 = vpop.f32.mrb[0].mxu0
    %v1728 = vpop.f32.mrb[0].mxu0
    %v1729 = vadd.f32 %v1609, %v1728
    %v1730 = vpop.f32.mrb[0].mxu0
    %1731 = vmatprep.mubr.bf16.mxu0 0
    %1732 = vmatmul.mubr.bf16.gmra.mrb[0].mxu0 %v282
    %v1733 = vpop.f32.mrb[0].mxu0
    %v1734 = vadd.f32 %v1609, %v1733
    %v1735 = vpop.f32.mrb[0].mxu0
    %v1736 = vpop.f32.mrb[0].mxu0
    %v1737 = vadd.f32 %v1609, %v1736
    %v1738 = vpop.f32.mrb[0].mxu0
    %1739 = vmatprep.mubr.bf16.mxu0 0
    %1740 = vmatmul.mubr.bf16.gmra.mrb[0].mxu0 %v283
    %v1741 = vpop.f32.mrb[0].mxu0
    %v1742 = vadd.f32 %v1609, %v1741
    %v1743 = vpop.f32.mrb[0].mxu0
    %v1744 = vpop.f32.mrb[0].mxu0
    %v1745 = vadd.f32 %v1609, %v1744
    %v1746 = vpop.f32.mrb[0].mxu0
    %1747 = vmatprep.mubr.bf16.mxu0 0
    %1748 = vmatmul.mubr.bf16.gmra.mrb[0].mxu0 %v284
    %v1749 = vpop.f32.mrb[0].mxu0
    %v1750 = vadd.f32 %v1609, %v1749
    %v1751 = vpop.f32.mrb[0].mxu0
    %v1752 = vpop.f32.mrb[0].mxu0
    %v1753 = vadd.f32 %v1609, %v1752
    %v1754 = vpop.f32.mrb[0].mxu0
    %1755 = vmatprep.mubr.bf16.mxu0 0
    %1756 = vmatmul.mubr.bf16.gmra.mrb[0].mxu0 %v285
    %v1757 = vpop.f32.mrb[0].mxu0
    %v1758 = vadd.f32 %v1609, %v1757
    %v1759 = vpop.f32.mrb[0].mxu0
    %v1760 = vpop.f32.mrb[0].mxu0
    %v1761 = vadd.f32 %v1609, %v1760
    %v1762 = vpop.f32.mrb[0].mxu0
    %1763 = vmatprep.mubr.bf16.mxu0 0
    %1764 = vmatmul.mubr.bf16.gmra.mrb[0].mxu0 %v286
    %v1765 = vpop.f32.mrb[0].mxu0
    %v1766 = vadd.f32 %v1609, %v1765
    %v1767 = vpop.f32.mrb[0].mxu0
    %v1768 = vpop.f32.mrb[0].mxu0
    %v1769 = vadd.f32 %v1609, %v1768
    %v1770 = vpop.f32.mrb[0].mxu0
    %1771 = vmatprep.mubr.bf16.mxu0 0
    %1772 = vmatmul.mubr.bf16.gmra.mrb[0].mxu0 %v287
    %v1773 = vpop.f32.mrb[0].mxu0
    %v1774 = vadd.f32 %v1609, %v1773
    %v1775 = vpop.f32.mrb[0].mxu0
    %v1776 = vpop.f32.mrb[0].mxu0
    %v1777 = vadd.f32 %v1609, %v1776
    %v1778 = vpop.f32.mrb[0].mxu0
    %1779 = vmatprep.mubr.bf16.mxu0 0
    %1780 = vmatmul.mubr.bf16.gmra.mrb[0].mxu0 %v288
    %v1781 = vpop.f32.mrb[0].mxu0
    %v1782 = vadd.f32 %v1609, %v1781
    %v1783 = vpop.f32.mrb[0].mxu0
    %v1784 = vpop.f32.mrb[0].mxu0
    %v1785 = vadd.f32 %v1609, %v1784
    %v1786 = vpop.f32.mrb[0].mxu0
    %1787 = vmatprep.mubr.bf16.mxu0 0
    %1788 = vmatmul.mubr.bf16.gmra.mrb[0].mxu0 %v289
    %v1789 = vpop.f32.mrb[0].mxu0
    %v1790 = vadd.f32 %v1609, %v1789
    %v1791 = vpop.f32.mrb[0].mxu0
    %v1792 = vpop.f32.mrb[0].mxu0
    %v1793 = vadd.f32 %v1609, %v1792
    %v1794 = vpop.f32.mrb[0].mxu0
    %1795 = vmatprep.mubr.bf16.mxu0 0
    %1796 = vmatmul.mubr.bf16.gmra.mrb[0].mxu0 %v290
    %v1797 = vpop.f32.mrb[0].mxu0
    %v1798 = vadd.f32 %v1609, %v1797
    %v1799 = vpop.f32.mrb[0].mxu0
    %v1800 = vpop.f32.mrb[0].mxu0
    %v1801 = vadd.f32 %v1609, %v1800
    %v1802 = vpop.f32.mrb[0].mxu0
    %1803 = vmatprep.mubr.bf16.mxu0 0
    %1804 = vmatmul.mubr.bf16.gmra.mrb[0].mxu0 %v291
    %v1805 = vpop.f32.mrb[0].mxu0
    %v1806 = vadd.f32 %v1609, %v1805
    %v1807 = vpop.f32.mrb[0].mxu0
    %v1808 = vpop.f32.mrb[0].mxu0
    %v1809 = vadd.f32 %v1609, %v1808
    %v1810 = vpop.f32.mrb[0].mxu0
    %1811 = vmatprep.mubr.bf16.mxu0 0
    %1812 = vmatmul.mubr.bf16.gmra.mrb[0].mxu0 %v292
    %v1813 = vpop.f32.mrb[0].mxu0
    %v1814 = vadd.f32 %v1609, %v1813
    %v1815 = vpop.f32.mrb[0].mxu0
    %v1816 = vpop.f32.mrb[0].mxu0
    %v1817 = vadd.f32 %v1609, %v1816
    %v1818 = vpop.f32.mrb[0].mxu0
    %1819 = vmatprep.mubr.bf16.mxu0 0
    %1820 = vmatmul.mubr.bf16.gmra.mrb[0].mxu0 %v293
    %v1821 = vpop.f32.mrb[0].mxu0
    %v1822 = vadd.f32 %v1609, %v1821
    %v1823 = vpop.f32.mrb[0].mxu0
    %v1824 = vpop.f32.mrb[0].mxu0
    %v1825 = vadd.f32 %v1609, %v1824
    %v1826 = vpop.f32.mrb[0].mxu0
    %1827 = vmatprep.mubr.bf16.mxu0 0
    %1828 = vmatmul.mubr.bf16.gmra.mrb[0].mxu0 %v294
    %v1829 = vpop.f32.mrb[0].mxu0
    %v1830 = vadd.f32 %v1609, %v1829
    %v1831 = vpop.f32.mrb[0].mxu0
    %v1832 = vpop.f32.mrb[0].mxu0
    %v1833 = vadd.f32 %v1609, %v1832
    %v1834 = vpop.f32.mrb[0].mxu0
    %1835 = vmatprep.mubr.bf16.mxu0 0
    %1836 = vmatmul.mubr.bf16.gmra.mrb[0].mxu0 %v295
    %v1837 = vpop.f32.mrb[0].mxu0
    %v1838 = vadd.f32 %v1609, %v1837
    %v1839 = vpop.f32.mrb[0].mxu0
    %v1840 = vpop.f32.mrb[0].mxu0
    %v1841 = vadd.f32 %v1609, %v1840
    %v1842 = vpop.f32.mrb[0].mxu0
    %1843 = vmatprep.mubr.bf16.mxu0 0
    %1844 = vmatmul.mubr.bf16.gmra.mrb[0].mxu0 %v296
    %v1845 = vpop.f32.mrb[0].mxu0
    %v1846 = vadd.f32 %v1609, %v1845
    %v1847 = vpop.f32.mrb[0].mxu0
    %v1848 = vpop.f32.mrb[0].mxu0
    %v1849 = vadd.f32 %v1609, %v1848
    %v1850 = vpop.f32.mrb[0].mxu0
    %1851 = vmatprep.mubr.bf16.mxu0 0
    %1852 = vmatmul.mubr.bf16.gmra.mrb[0].mxu0 %v297
    %v1853 = vpop.f32.mrb[0].mxu0
    %v1854 = vadd.f32 %v1609, %v1853
    %v1855 = vpop.f32.mrb[0].mxu0
    %v1856 = vpop.f32.mrb[0].mxu0
    %v1857 = vadd.f32 %v1609, %v1856
    %v1858 = vpop.f32.mrb[0].mxu0
    %1859 = vmatprep.mubr.bf16.mxu0 0
    %1860 = vmatmul.mubr.bf16.gmra.mrb[0].mxu0 %v298
    %v1861 = vpop.f32.mrb[0].mxu0
    %v1862 = vadd.f32 %v1609, %v1861
    %v1863 = vpop.f32.mrb[0].mxu0
    %v1864 = vpop.f32.mrb[0].mxu0
    %v1865 = vadd.f32 %v1609, %v1864
    %v1866 = vpop.f32.mrb[0].mxu0
    %1867 = vmatprep.mubr.bf16.mxu0 0
    %1868 = vmatmul.mubr.bf16.gmra.mrb[0].mxu0 %v299
    %v1869 = vpop.f32.mrb[0].mxu0
    %v1870 = vadd.f32 %v1609, %v1869
    %v1871 = vpop.f32.mrb[0].mxu0
    %v1872 = vpop.f32.mrb[0].mxu0
    %v1873 = vadd.f32 %v1609, %v1872
    %v1874 = vpop.f32.mrb[0].mxu0
    %1875 = vmatprep.mubr.bf16.mxu0 0
    %1876 = vmatmul.mubr.bf16.gmra.mrb[0].mxu0 %v300
    %v1877 = vpop.f32.mrb[0].mxu0
    %v1878 = vadd.f32 %v1609, %v1877
    %v1879 = vpop.f32.mrb[0].mxu0
    %v1880 = vpop.f32.mrb[0].mxu0
    %v1881 = vadd.f32 %v1609, %v1880
    %v1882 = vpop.f32.mrb[0].mxu0
    %1883 = vmatprep.mubr.bf16.mxu0 0
    %1884 = vmatmul.mubr.bf16.gmra.mrb[0].mxu0 %v301
    %v1885 = vpop.f32.mrb[0].mxu0
    %v1886 = vadd.f32 %v1609, %v1885
    %v1887 = vpop.f32.mrb[0].mxu0
    %v1888 = vpop.f32.mrb[0].mxu0
    %v1889 = vadd.f32 %v1609, %v1888
    %v1890 = vpop.f32.mrb[0].mxu0
    %1891 = vmatprep.mubr.bf16.mxu0 0
    %1892 = vmatmul.mubr.bf16.gmra.mrb[0].mxu0 %v302
    %v1893 = vpop.f32.mrb[0].mxu0
    %v1894 = vadd.f32 %v1609, %v1893
    %v1895 = vpop.f32.mrb[0].mxu0
    %v1896 = vpop.f32.mrb[0].mxu0
    %v1897 = vadd.f32 %v1609, %v1896
    %v1898 = vpop.f32.mrb[0].mxu0
    %1899 = vmatprep.mubr.bf16.mxu0 0
    %1900 = vmatmul.mubr.bf16.gmra.mrb[0].mxu0 %v303
    %v1901 = vpop.f32.mrb[0].mxu0
    %v1902 = vadd.f32 %v1609, %v1901
    %v1903 = vpop.f32.mrb[0].mxu0
    %v1904 = vpop.f32.mrb[0].mxu0
    %v1905 = vadd.f32 %v1609, %v1904
    %v1906 = vpop.f32.mrb[0].mxu0
    %1907 = vmatprep.mubr.bf16.mxu0 0
    %1908 = vmatmul.mubr.bf16.gmra.mrb[0].mxu0 %v304
    %v1909 = vpop.f32.mrb[0].mxu0
    %v1910 = vadd.f32 %v1609, %v1909
    %v1911 = vpop.f32.mrb[0].mxu0
    %v1912 = vpop.f32.mrb[0].mxu0
    %v1913 = vadd.f32 %v1609, %v1912
    %v1914 = vpop.f32.mrb[0].mxu0
    %1915 = vmatprep.mubr.bf16.mxu0 0
    %1916 = vmatmul.mubr.bf16.gmra.mrb[0].mxu0 %v305
    %v1917 = vpop.f32.mrb[0].mxu0
    %v1918 = vadd.f32 %v1609, %v1917
    %v1919 = vpop.f32.mrb[0].mxu0
    %v1920 = vpop.f32.mrb[0].mxu0
    %v1921 = vadd.f32 %v1609, %v1920
    %v1922 = vpop.f32.mrb[0].mxu0
    %1923 = vmatprep.mubr.bf16.mxu0 0
    %1924 = vmatmul.mubr.bf16.gmra.mrb[0].mxu0 %v306
    %v1925 = vpop.f32.mrb[0].mxu0
    %v1926 = vadd.f32 %v1609, %v1925
    %v1927 = vpop.f32.mrb[0].mxu0
    %v1928 = vpop.f32.mrb[0].mxu0
    %v1929 = vadd.f32 %v1609, %v1928
    %v1930 = vpop.f32.mrb[0].mxu0
    %1931 = vmatprep.mubr.bf16.mxu0 0
    %1932 = vmatmul.mubr.bf16.gmra.mrb[0].mxu0 %v307
    %v1933 = vpop.f32.mrb[0].mxu0
    %v1934 = vadd.f32 %v1609, %v1933
    %v1935 = vpop.f32.mrb[0].mxu0
    %v1936 = vpop.f32.mrb[0].mxu0
    %v1937 = vadd.f32 %v1609, %v1936
    %v1938 = vpop.f32.mrb[0].mxu0
    %1939 = vmatprep.mubr.bf16.mxu0 0
    %1940 = vmatmul.mubr.bf16.gmra.mrb[0].mxu0 %v308
    %v1941 = vpop.f32.mrb[0].mxu0
    %v1942 = vadd.f32 %v1609, %v1941
    %v1943 = vpop.f32.mrb[0].mxu0
    %v1944 = vpop.f32.mrb[0].mxu0
    %v1945 = vadd.f32 %v1609, %v1944
    %v1946 = vpop.f32.mrb[0].mxu0
    %1947 = vdwg.mxu0
    %v1948 = vpack.c.bf16 %v1697, %v1694
    %v1949 = vpack.c.bf16 %v1705, %v1702
    %v1950 = vpack.c.bf16 %v1713, %v1710
    %v1951 = vpack.c.bf16 %v1721, %v1718
    %v1952 = vpack.c.bf16 %v1729, %v1726
    %v1953 = vpack.c.bf16 %v1737, %v1734
    %v1954 = vpack.c.bf16 %v1745, %v1742
    %v1955 = vpack.c.bf16 %v1753, %v1750
    %v1956 = vpack.c.bf16 %v1761, %v1758
    %v1957 = vpack.c.bf16 %v1769, %v1766
    %v1958 = vpack.c.bf16 %v1777, %v1774
    %v1959 = vpack.c.bf16 %v1785, %v1782
    %v1960 = vpack.c.bf16 %v1793, %v1790
    %v1961 = vpack.c.bf16 %v1801, %v1798
    %v1962 = vpack.c.bf16 %v1809, %v1806
    %v1963 = vpack.c.bf16 %v1817, %v1814
    %v1964 = vpack.c.bf16 %v1825, %v1822
    %v1965 = vpack.c.bf16 %v1833, %v1830
    %v1966 = vpack.c.bf16 %v1841, %v1838
    %v1967 = vpack.c.bf16 %v1849, %v1846
    %v1968 = vpack.c.bf16 %v1857, %v1854
    %v1969 = vpack.c.bf16 %v1865, %v1862
    %v1970 = vpack.c.bf16 %v1873, %v1870
    %v1971 = vpack.c.bf16 %v1881, %v1878
    %v1972 = vpack.c.bf16 %v1889, %v1886
    %v1973 = vpack.c.bf16 %v1897, %v1894
    %v1974 = vpack.c.bf16 %v1905, %v1902
    %v1975 = vpack.c.bf16 %v1913, %v1910
    %v1976 = vpack.c.bf16 %v1921, %v1918
    %v1977 = vpack.c.bf16 %v1929, %v1926
    %v1978 = vpack.c.bf16 %v1937, %v1934
    %v1979 = vpack.c.bf16 %v1945, %v1942
    %v2012 = vunpack.c.l.b16 %v1948
    %v2013 = vunpack.c.h.b16 %v1948
    %v2014 = vunpack.c.l.b16 %v1949
    %v2015 = vunpack.c.h.b16 %v1949
    %v2016 = vunpack.c.l.b16 %v1950
    %v2017 = vunpack.c.h.b16 %v1950
    %v2018 = vunpack.c.l.b16 %v1951
    %v2019 = vunpack.c.h.b16 %v1951
    %v2020 = vunpack.c.l.b16 %v1952
    %v2021 = vunpack.c.h.b16 %v1952
    %v2022 = vunpack.c.l.b16 %v1953
    %v2023 = vunpack.c.h.b16 %v1953
    %v2024 = vunpack.c.l.b16 %v1954
    %v2025 = vunpack.c.h.b16 %v1954
    %v2026 = vunpack.c.l.b16 %v1955
    %v2027 = vunpack.c.h.b16 %v1955
    %v2028 = vunpack.c.l.b16 %v1956
    %v2029 = vunpack.c.h.b16 %v1956
    %v2030 = vunpack.c.l.b16 %v1957
    %v2031 = vunpack.c.h.b16 %v1957
    %v2032 = vunpack.c.l.b16 %v1958
    %v2033 = vunpack.c.h.b16 %v1958
    %v2034 = vunpack.c.l.b16 %v1959
    %v2035 = vunpack.c.h.b16 %v1959
    %v2036 = vunpack.c.l.b16 %v1960
    %v2037 = vunpack.c.h.b16 %v1960
    %v2038 = vunpack.c.l.b16 %v1961
    %v2039 = vunpack.c.h.b16 %v1961
    %v2040 = vunpack.c.l.b16 %v1962
    %v2041 = vunpack.c.h.b16 %v1962
    %v2042 = vunpack.c.l.b16 %v1963
    %v2043 = vunpack.c.h.b16 %v1963
    %v2044 = vunpack.c.l.b16 %v1964
    %v2045 = vunpack.c.h.b16 %v1964
    %v2046 = vunpack.c.l.b16 %v1965
    %v2047 = vunpack.c.h.b16 %v1965
    %v2048 = vunpack.c.l.b16 %v1966
    %v2049 = vunpack.c.h.b16 %v1966
    %v2050 = vunpack.c.l.b16 %v1967
    %v2051 = vunpack.c.h.b16 %v1967
    %v2052 = vunpack.c.l.b16 %v1968
    %v2053 = vunpack.c.h.b16 %v1968
    %v2054 = vunpack.c.l.b16 %v1969
    %v2055 = vunpack.c.h.b16 %v1969
    %v2056 = vunpack.c.l.b16 %v1970
    %v2057 = vunpack.c.h.b16 %v1970
    %v2058 = vunpack.c.l.b16 %v1971
    %v2059 = vunpack.c.h.b16 %v1971
    %v2060 = vunpack.c.l.b16 %v1972
    %v2061 = vunpack.c.h.b16 %v1972
    %v2062 = vunpack.c.l.b16 %v1973
    %v2063 = vunpack.c.h.b16 %v1973
    %v2064 = vunpack.c.l.b16 %v1974
    %v2065 = vunpack.c.h.b16 %v1974
    %v2066 = vunpack.c.l.b16 %v1975
    %v2067 = vunpack.c.h.b16 %v1975
    %v2068 = vunpack.c.l.b16 %v1976
    %v2069 = vunpack.c.h.b16 %v1976
    %v2070 = vunpack.c.l.b16 %v1977
    %v2071 = vunpack.c.h.b16 %v1977
    %v2072 = vunpack.c.l.b16 %v1978
    %v2073 = vunpack.c.h.b16 %v1978
    %v2074 = vunpack.c.l.b16 %v1979
    %v2075 = vunpack.c.h.b16 %v1979
    %v2076 = vpack.c.b16 %v2012, %v2012
    %v2077 = vpack.c.b16 %v2013, %v2013
    %v2078 = vpack.c.b16 %v2014, %v2014
    %v2079 = vpack.c.b16 %v2015, %v2015
    %v2080 = vpack.c.b16 %v2016, %v2016
    %v2081 = vpack.c.b16 %v2017, %v2017
    %v2082 = vpack.c.b16 %v2018, %v2018
    %v2083 = vpack.c.b16 %v2019, %v2019
    %v2084 = vpack.c.b16 %v2020, %v2020
    %v2085 = vpack.c.b16 %v2021, %v2021
    %v2086 = vpack.c.b16 %v2022, %v2022
    %v2087 = vpack.c.b16 %v2023, %v2023
    %v2088 = vpack.c.b16 %v2024, %v2024
    %v2089 = vpack.c.b16 %v2025, %v2025
    %v2090 = vpack.c.b16 %v2026, %v2026
    %v2091 = vpack.c.b16 %v2027, %v2027
    %v2092 = vpack.c.b16 %v2028, %v2028
    %v2093 = vpack.c.b16 %v2029, %v2029
    %v2094 = vpack.c.b16 %v2030, %v2030
    %v2095 = vpack.c.b16 %v2031, %v2031
    %v2096 = vpack.c.b16 %v2032, %v2032
    %v2097 = vpack.c.b16 %v2033, %v2033
    %v2098 = vpack.c.b16 %v2034, %v2034
    %v2099 = vpack.c.b16 %v2035, %v2035
    %v2100 = vpack.c.b16 %v2036, %v2036
    %v2101 = vpack.c.b16 %v2037, %v2037
    %v2102 = vpack.c.b16 %v2038, %v2038
    %v2103 = vpack.c.b16 %v2039, %v2039
    %v2104 = vpack.c.b16 %v2040, %v2040
    %v2105 = vpack.c.b16 %v2041, %v2041
    %v2106 = vpack.c.b16 %v2042, %v2042
    %v2107 = vpack.c.b16 %v2043, %v2043
    %v2108 = vpack.c.b16 %v2044, %v2044
    %v2109 = vpack.c.b16 %v2045, %v2045
    %v2110 = vpack.c.b16 %v2046, %v2046
    %v2111 = vpack.c.b16 %v2047, %v2047
    %v2112 = vpack.c.b16 %v2048, %v2048
    %v2113 = vpack.c.b16 %v2049, %v2049
    %v2114 = vpack.c.b16 %v2050, %v2050
    %v2115 = vpack.c.b16 %v2051, %v2051
    %v2116 = vpack.c.b16 %v2052, %v2052
    %v2117 = vpack.c.b16 %v2053, %v2053
    %v2118 = vpack.c.b16 %v2054, %v2054
    %v2119 = vpack.c.b16 %v2055, %v2055
    %v2120 = vpack.c.b16 %v2056, %v2056
    %v2121 = vpack.c.b16 %v2057, %v2057
    %v2122 = vpack.c.b16 %v2058, %v2058
    %v2123 = vpack.c.b16 %v2059, %v2059
    %v2124 = vpack.c.b16 %v2060, %v2060
    %v2125 = vpack.c.b16 %v2061, %v2061
    %v2126 = vpack.c.b16 %v2062, %v2062
    %v2127 = vpack.c.b16 %v2063, %v2063
    %v2128 = vpack.c.b16 %v2064, %v2064
    %v2129 = vpack.c.b16 %v2065, %v2065
    %v2130 = vpack.c.b16 %v2066, %v2066
    %v2131 = vpack.c.b16 %v2067, %v2067
    %v2132 = vpack.c.b16 %v2068, %v2068
    %v2133 = vpack.c.b16 %v2069, %v2069
    %v2134 = vpack.c.b16 %v2070, %v2070
    %v2135 = vpack.c.b16 %v2071, %v2071
    %v2136 = vpack.c.b16 %v2072, %v2072
    %v2137 = vpack.c.b16 %v2073, %v2073
    %v2138 = vpack.c.b16 %v2074, %v2074
    %v2139 = vpack.c.b16 %v2075, %v2075
    %2204 = vst [vmem:[#allocation9] sm:$0xf] %v2076
    %2205 = vst [vmem:[#allocation9 + $0x4] sm:$0xf] %v2077
    %2206 = vst [vmem:[#allocation9 + $0x8] sm:$0xf] %v2078
    %2207 = vst [vmem:[#allocation9 + $0xc] sm:$0xf] %v2079
    %2208 = vst [vmem:[#allocation9 + $0x10] sm:$0xf] %v2080
    %2209 = vst [vmem:[#allocation9 + $0x14] sm:$0xf] %v2081
    %2210 = vst [vmem:[#allocation9 + $0x18] sm:$0xf] %v2082
    %2211 = vst [vmem:[#allocation9 + $0x1c] sm:$0xf] %v2083
    %2212 = vst [vmem:[#allocation9 + $0x20] sm:$0xf] %v2084
    %2213 = vst [vmem:[#allocation9 + $0x24] sm:$0xf] %v2085
    %2214 = vst [vmem:[#allocation9 + $0x28] sm:$0xf] %v2086
    %2215 = vst [vmem:[#allocation9 + $0x2c] sm:$0xf] %v2087
    %2216 = vst [vmem:[#allocation9 + $0x30] sm:$0xf] %v2088
    %2217 = vst [vmem:[#allocation9 + $0x34] sm:$0xf] %v2089
    %2218 = vst [vmem:[#allocation9 + $0x38] sm:$0xf] %v2090
    %2219 = vst [vmem:[#allocation9 + $0x3c] sm:$0xf] %v2091
    %2220 = vst [vmem:[#allocation9 + $0x40] sm:$0xf] %v2092
    %2221 = vst [vmem:[#allocation9 + $0x44] sm:$0xf] %v2093
    %2222 = vst [vmem:[#allocation9 + $0x48] sm:$0xf] %v2094
    %2223 = vst [vmem:[#allocation9 + $0x4c] sm:$0xf] %v2095
    %2224 = vst [vmem:[#allocation9 + $0x50] sm:$0xf] %v2096
    %2225 = vst [vmem:[#allocation9 + $0x54] sm:$0xf] %v2097
    %2226 = vst [vmem:[#allocation9 + $0x58] sm:$0xf] %v2098
    %2227 = vst [vmem:[#allocation9 + $0x5c] sm:$0xf] %v2099
    %2228 = vst [vmem:[#allocation9 + $0x60] sm:$0xf] %v2100
    %2229 = vst [vmem:[#allocation9 + $0x64] sm:$0xf] %v2101
    %2230 = vst [vmem:[#allocation9 + $0x68] sm:$0xf] %v2102
    %2231 = vst [vmem:[#allocation9 + $0x6c] sm:$0xf] %v2103
    %2232 = vst [vmem:[#allocation9 + $0x70] sm:$0xf] %v2104
    %2233 = vst [vmem:[#allocation9 + $0x74] sm:$0xf] %v2105
    %2234 = vst [vmem:[#allocation9 + $0x78] sm:$0xf] %v2106
    %2235 = vst [vmem:[#allocation9 + $0x7c] sm:$0xf] %v2107
    %2236 = vst [vmem:[#allocation9 + $0x80] sm:$0xf] %v2108
    %2237 = vst [vmem:[#allocation9 + $0x84] sm:$0xf] %v2109
    %2238 = vst [vmem:[#allocation9 + $0x88] sm:$0xf] %v2110
    %2239 = vst [vmem:[#allocation9 + $0x8c] sm:$0xf] %v2111
    %2240 = vst [vmem:[#allocation9 + $0x90] sm:$0xf] %v2112
    %2241 = vst [vmem:[#allocation9 + $0x94] sm:$0xf] %v2113
    %2242 = vst [vmem:[#allocation9 + $0x98] sm:$0xf] %v2114
    %2243 = vst [vmem:[#allocation9 + $0x9c] sm:$0xf] %v2115
    %2244 = vst [vmem:[#allocation9 + $0xa0] sm:$0xf] %v2116
    %2245 = vst [vmem:[#allocation9 + $0xa4] sm:$0xf] %v2117
    %2246 = vst [vmem:[#allocation9 + $0xa8] sm:$0xf] %v2118
    %2247 = vst [vmem:[#allocation9 + $0xac] sm:$0xf] %v2119
    %2248 = vst [vmem:[#allocation9 + $0xb0] sm:$0xf] %v2120
    %2249 = vst [vmem:[#allocation9 + $0xb4] sm:$0xf] %v2121
    %2250 = vst [vmem:[#allocation9 + $0xb8] sm:$0xf] %v2122
    %2251 = vst [vmem:[#allocation9 + $0xbc] sm:$0xf] %v2123
    %2252 = vst [vmem:[#allocation9 + $0xc0] sm:$0xf] %v2124
    %2253 = vst [vmem:[#allocation9 + $0xc4] sm:$0xf] %v2125
    %2254 = vst [vmem:[#allocation9 + $0xc8] sm:$0xf] %v2126
    %2255 = vst [vmem:[#allocation9 + $0xcc] sm:$0xf] %v2127
    %2256 = vst [vmem:[#allocation9 + $0xd0] sm:$0xf] %v2128
    %2257 = vst [vmem:[#allocation9 + $0xd4] sm:$0xf] %v2129
    %2258 = vst [vmem:[#allocation9 + $0xd8] sm:$0xf] %v2130
    %2259 = vst [vmem:[#allocation9 + $0xdc] sm:$0xf] %v2131
    %2260 = vst [vmem:[#allocation9 + $0xe0] sm:$0xf] %v2132
    %2261 = vst [vmem:[#allocation9 + $0xe4] sm:$0xf] %v2133
    %2262 = vst [vmem:[#allocation9 + $0xe8] sm:$0xf] %v2134
    %2263 = vst [vmem:[#allocation9 + $0xec] sm:$0xf] %v2135
    %2264 = vst [vmem:[#allocation9 + $0xf0] sm:$0xf] %v2136
    %2265 = vst [vmem:[#allocation9 + $0xf4] sm:$0xf] %v2137
    %2266 = vst [vmem:[#allocation9 + $0xf8] sm:$0xf] %v2138
    %2267 = vst [vmem:[#allocation9 + $0xfc] sm:$0xf] %v2139
    // Predicated region
    $region38: #{tpu_custom_call.1} parent=1 // pred_check
      _
    $region39: #{tpu_custom_call.1} parent=1 // pred_check_branch
      %2269 = sbr.rel (0) target = $region41
    $region40: #{tpu_custom_call.1} parent=1 // pred_region
      %s2271 = ssub.s32 4096, 4096
      %2272 = vsyncadd [#allocation4], %s2271
      %s2273 = sshll.u32 [#allocation8], 4
      %s2274 = int_to_ptr.vmem [resolvable:$true] %s2273
      %2279 = dma.vmem_to_hbm [thread:$0]  %s2274, 4096, %s6, [#allocation4], 64, 64, 4
    $region41: #{tpu_custom_call.1} parent=1 // pred_fallthru
      _
    // Predicated region
    $region42: #{tpu_custom_call.1} parent=1 // pred_check
      _
    $region43: #{tpu_custom_call.1} parent=1 // pred_check_branch
      %2281 = sbr.rel (0) target = $region45
    $region44: #{tpu_custom_call.1} parent=1 // pred_region
      %s2283 = ssub.s32 4096, 4096
      %2284 = vsyncadd [#allocation10], %s2283
      %s2285 = sshll.u32 [#allocation9], 4
      %s2286 = int_to_ptr.vmem [resolvable:$true] %s2285
      %2291 = dma.vmem_to_hbm [thread:$0]  %s2286, 4096, %s7, [#allocation10], 64, 64, 4
    $region45: #{tpu_custom_call.1} parent=1 // pred_fallthru
      _
    // Predicated region
    $region46: #{tpu_custom_call.1} parent=1 // pred_check
      _
    $region47: #{tpu_custom_call.1} parent=1 // pred_check_branch
      %2293 = sbr.rel (0) target = $region49
    $region48: #{tpu_custom_call.1} parent=1 // pred_region
      %2294 = dma.done [#allocation4], 4096
    $region49: #{tpu_custom_call.1} parent=1 // pred_fallthru
      _
    // Predicated region
    $region50: #{tpu_custom_call.1} parent=1 // pred_check
      _
    $region51: #{tpu_custom_call.1} parent=1 // pred_check_branch
      %2296 = sbr.rel (0) target = $region53
    $region52: #{tpu_custom_call.1} parent=1 // pred_region
      %2297 = dma.done [#allocation10], 4096
    $region53: #{tpu_custom_call.1} parent=1 // pred_fallthru
      _
    %2298 = vsyncpa [#allocation3], 1
    %2299 = vsyncpa [#allocation6], 1
    %2300 = vsyncpa [#allocation4], 1
    %2301 = vsyncpa [#allocation10], 1

</llo_original>
